<compile_context>
chip_gen: v7x
topology: tpu7x:2x2x1
jax: 0.10.0
libtpu: 0.0.40
codegen_flags: <defaults>
</compile_context>

<pallas_src>
import functools

import jax
import jax.numpy as jnp
from jax.experimental import pallas as pl
from jax.experimental.pallas import tpu as pltpu

LANE = 128
SUB = 8


def _round_up(x: int, m: int) -> int:
    return (x + m - 1) // m * m


# ----------------------- kernel 1: conv stem + global average pool -----------------------

def _conv_gap_kernel(
    mask_ref,   # (1, band)      f32  1.0 for valid output pixels of this band, else 0.0
    xc_ref,     # (Cin, band)    bf16 flat zero-padded image, lane chunk t
    xn_ref,     # (Cin, band)    bf16 flat zero-padded image, lane chunk t+1 (halo)
    wc_ref,     # (Cf_p, 9*Cin)  bf16 conv weights, columns ordered (dy, dx, cin)
    bc_ref,     # (Cf_p, 1)      f32  conv bias
    o_ref,      # (Cf_p, 1)      f32  pooled features (column form) for this batch element
    pool_ref,   # (Cf_p, band)   f32  VMEM scratch: running per-lane pooled sums
    *,
    band: int,
    wp: int,
    cin: int,
    inv_hw: float,
):
    t = pl.program_id(1)               # pixel-band index (reduction axis, "arbitrary")
    nb = pl.num_programs(1)

    @pl.when(t == 0)
    def _init():
        pool_ref[...] = jnp.zeros_like(pool_ref)

    # Current band + halo; pixels live in the lane axis -> tap shifts are cheap lane shifts.
    win = jnp.concatenate([xc_ref[...], xn_ref[...]], axis=1)     # (Cin, 2*band) bf16
    w_all = wc_ref[...]                                           # (Cf_p, 9*Cin) bf16
    cf_p = w_all.shape[0]

    # 3x3 conv as 9 shifted (Cf_p, Cin) @ (Cin, band) MXU dots, accumulated in registers.
    acc = jnp.zeros((cf_p, band), jnp.float32)
    for k in range(9):
        dy, dx = k // 3, k % 3
        off = dy * wp + dx                                        # static lane offset
        xs = win[:, off:off + band]                               # (Cin, band) bf16
        wt = w_all[:, k * cin:(k + 1) * cin]                      # (Cf_p, Cin) bf16
        acc += jnp.dot(wt, xs, preferred_element_type=jnp.float32)

    acc = jnp.maximum(acc + bc_ref[...], 0.0) * mask_ref[...]     # bias + ReLU + validity mask
    pool_ref[...] += acc                                          # single pool pass per band

    @pl.when(t == nb - 1)
    def _finalize():
        o_ref[...] = jnp.sum(pool_ref[...], axis=1, keepdims=True) * inv_hw


# ----------------------------- kernel 2: batched MLP head -----------------------------

def _head_kernel(f_ref, w1_ref, b1_ref, w2_ref, b2_ref, o_ref):
    # Linear -> ReLU -> (Dropout == identity at inference) -> Linear, all in f32.
    h = jnp.dot(f_ref[...], w1_ref[...], preferred_element_type=jnp.float32) + b1_ref[...]
    h = jnp.maximum(h, 0.0)
    o_ref[...] = jnp.dot(h, w2_ref[...], preferred_element_type=jnp.float32) + b2_ref[...]


# ---------------------------------- wrapper ----------------------------------

def animal_model_forward(x_nchw, params, *, pix_tile: int = 128):
    """AnimalModel.forward: logits = head(backbone(x))."""
    w_conv, b_conv, w1, b1, w2, b2 = params
    B, Cin, H, W = x_nchw.shape
    Cf = w_conv.shape[-1]
    Fh = w1.shape[-1]
    Nc = w2.shape[-1]
    Cf_p, Fh_p, Nc_p = (_round_up(d, LANE) for d in (Cf, Fh, Nc))

    Wp = W + 2                                   # zero-padded width
    n_out = H * Wp                               # conv outputs on the padded-width flat grid
    halo = 2 * Wp + 2                            # largest tap lane shift
    band = max(_round_up(pix_tile, LANE), _round_up(halo, LANE))
    nb = -(-n_out // band)                       # pixel bands (reduction grid axis)
    Lp = (nb + 1) * band                         # flat length incl. the last band's halo chunk

    # -------- layout prep (pure data movement): lane-dense flat image (B, Cin, Lp) --------
    xp = jnp.pad(x_nchw, ((0, 0), (0, 0), (1, 1), (1, 1)))        # SAME zero padding
    xflat = xp.reshape(B, Cin, (H + 2) * Wp)
    xflat = jnp.pad(xflat, ((0, 0), (0, 0), (0, Lp - (H + 2) * Wp)))
    xflat = xflat.astype(jnp.bfloat16)

    # validity mask, lane-dense (nb, 1, band): drops width-pad cols and the last band's tail
    j = jnp.arange(nb * band, dtype=jnp.int32)
    mask = ((j < n_out) & ((j % Wp) < W)).astype(jnp.float32).reshape(nb, 1, band)

    # conv weights (3,3,Cin,Cf) HWIO -> (Cf_p, 9*Cin), columns ordered (dy, dx, cin)
    wc = jnp.transpose(w_conv, (3, 0, 1, 2)).reshape(Cf, 9 * Cin)
    wc = jnp.pad(wc, ((0, Cf_p - Cf), (0, 0))).astype(jnp.bfloat16)
    bc = jnp.pad(b_conv, (0, Cf_p - Cf)).reshape(Cf_p, 1).astype(jnp.float32)

    # explicit VMEM budget (v5e scoped default is only 16 MiB; v7x physical VMEM is 64 MiB)
    blk_x = SUB * band * 2
    blk_mask = SUB * band * 4
    blk_w = Cf_p * LANE * 2
    blk_b = Cf_p * LANE * 4
    blk_o = Cf_p * LANE * 4
    vmem_bytes = 2 * (2 * blk_x + blk_mask + blk_w + blk_b + blk_o) + Cf_p * band * 4
    vmem_limit = int(min(96 * 2**20, max(4 * vmem_bytes, 16 * 2**20)))

    kernel = functools.partial(_conv_gap_kernel, band=band, wp=Wp, cin=Cin,
                               inv_hw=1.0 / float(H * W))

    pooled = pl.pallas_call(
        kernel,
        out_shape=jax.ShapeDtypeStruct((B, Cf_p, 1), jnp.float32),
        grid_spec=pltpu.PrefetchScalarGridSpec(
            num_scalar_prefetch=0,
            grid=(B, nb),                        # batch ("parallel") x pixel band ("arbitrary")
            in_specs=[
                pl.BlockSpec((None, 1, band), lambda b, t: (t, 0, 0)),        # mask
                pl.BlockSpec((None, Cin, band), lambda b, t: (b, 0, t)),      # image chunk t
                pl.BlockSpec((None, Cin, band), lambda b, t: (b, 0, t + 1)),  # halo chunk t+1
                pl.BlockSpec((Cf_p, 9 * Cin), lambda b, t: (0, 0)),           # conv weights
                pl.BlockSpec((Cf_p, 1), lambda b, t: (0, 0)),                 # conv bias
            ],
            out_specs=pl.BlockSpec((None, Cf_p, 1), lambda b, t: (b, 0, 0)),
            scratch_shapes=[pltpu.VMEM((Cf_p, band), jnp.float32)],
        ),
        compiler_params=pltpu.CompilerParams(
            dimension_semantics=("parallel", "arbitrary"),
            vmem_limit_bytes=vmem_limit,
        ),
    )(mask, xflat, xflat, wc, bc)

    # -------- batched MLP head (f32): Linear -> ReLU -> Dropout(identity) -> Linear --------
    Bp = _round_up(B, SUB)
    feats = jnp.pad(pooled.reshape(B, Cf_p), ((0, Bp - B), (0, 0)))
    w1p = jnp.pad(w1, ((0, Cf_p - Cf), (0, Fh_p - Fh))).astype(jnp.float32)
    b1p = jnp.pad(b1, (0, Fh_p - Fh)).reshape(1, Fh_p).astype(jnp.float32)
    w2p = jnp.pad(w2, ((0, Fh_p - Fh), (0, Nc_p - Nc))).astype(jnp.float32)
    b2p = jnp.pad(b2, (0, Nc_p - Nc)).reshape(1, Nc_p).astype(jnp.float32)

    logits = pl.pallas_call(
        _head_kernel,
        out_shape=jax.ShapeDtypeStruct((Bp, Nc_p), jnp.float32),
        grid_spec=pltpu.PrefetchScalarGridSpec(
            num_scalar_prefetch=0,
            grid=(1,),
            in_specs=[
                pl.BlockSpec((Bp, Cf_p), lambda i: (0, 0)),
                pl.BlockSpec((Cf_p, Fh_p), lambda i: (0, 0)),
                pl.BlockSpec((1, Fh_p), lambda i: (0, 0)),
                pl.BlockSpec((Fh_p, Nc_p), lambda i: (0, 0)),
                pl.BlockSpec((1, Nc_p), lambda i: (0, 0)),
            ],
            out_specs=pl.BlockSpec((Bp, Nc_p), lambda i: (0, 0)),
        ),
        compiler_params=pltpu.CompilerParams(dimension_semantics=("arbitrary",)),
    )(feats, w1p, b1p, w2p, b2p)

    return logits[:B, :Nc]                       # drop padding -> (B, num_classes)


# -------------------------- pure-JAX reference & params --------------------------

def animal_model_reference(x_nchw, params):
    """f32 reference: conv3x3 SAME + bias + ReLU + GAP -> Linear -> ReLU -> Linear."""
    w_conv, b_conv, w1, b1, w2, b2 = params
    x = jnp.transpose(x_nchw, (0, 2, 3, 1)).astype(jnp.float32)
    y = jax.lax.conv_general_dilated(x, w_conv, (1, 1), "SAME",
                                     dimension_numbers=("NHWC", "HWIO", "NHWC"))
    y = jnp.maximum(y + b_conv[None, None, None, :], 0.0)
    feats = y.mean(axis=(1, 2))
    h = jnp.maximum(feats @ w1 + b1, 0.0)
    return h @ w2 + b2


def init_params(key, cin, in_features, num_features, num_classes):
    k = jax.random.split(key, 6)
    w_conv = jax.random.normal(k[0], (3, 3, cin, in_features), jnp.float32) * 0.05
    b_conv = jax.random.normal(k[1], (in_features,), jnp.float32) * 0.01
    w1 = jax.random.normal(k[2], (in_features, num_features), jnp.float32) * 0.05
    b1 = jax.random.normal(k[3], (num_features,), jnp.float32) * 0.01
    w2 = jax.random.normal(k[4], (num_features, num_classes), jnp.float32) * 0.05
    b2 = jax.random.normal(k[5], (num_classes,), jnp.float32) * 0.01
    return (w_conv, b_conv, w1, b1, w2, b2)


if __name__ == "__main__":
    B, Cin, H, W = 2, 3, 16, 16               # image batch (NCHW)
    in_features = 32                          # backbone feature dim (classifier.in_features)
    num_features = 64                         # config.model.num_features (head hidden)
    num_classes = 5                           # config.model.num_classes

    key = jax.random.PRNGKey(0)
    kx, kp = jax.random.split(key)
    x = jax.random.normal(kx, (B, Cin, H, W), jnp.float32)
    params = init_params(kp, Cin, in_features, num_features, num_classes)

    fwd = jax.jit(functools.partial(animal_model_forward, pix_tile=128))
    logits = jax.block_until_ready(fwd(x, params))

    assert logits.shape == (B, num_classes), logits.shape
    assert logits.dtype == jnp.float32, logits.dtype

    ref = animal_model_reference(x, params)
    err = float(jnp.max(jnp.abs(logits - ref)))
    assert err < 5e-2, f"max abs err vs reference: {err}"
    print("KERNEL_OK")
</pallas_src>

<mosaic_0001>
module attributes {stable_mosaic.version = 11 : i64} {
  func.func @_head_kernel(%arg0: i32, %arg1: memref<8x128xf32, #tpu.memory_space<vmem>>, %arg2: memref<128x128xf32, #tpu.memory_space<vmem>>, %arg3: memref<1x128xf32, #tpu.memory_space<vmem>>, %arg4: memref<128x128xf32, #tpu.memory_space<vmem>>, %arg5: memref<1x128xf32, #tpu.memory_space<vmem>>, %arg6: memref<8x128xf32, #tpu.memory_space<vmem>>) attributes {dimension_semantics = [#tpu.dimension_semantics<arbitrary>], iteration_bounds = array<i64: 1>, scalar_prefetch = 0 : i64, scratch_operands = 0 : i64, tpu.core_type = #tpu.core_type<tc>, window_params = [{pipeline_mode = #tpu.pipeline_mode<synchronous>, transform_indices = @transform_0, window_bounds = array<i64: 8, 128>}, {pipeline_mode = #tpu.pipeline_mode<synchronous>, transform_indices = @transform_1, window_bounds = array<i64: 128, 128>}, {pipeline_mode = #tpu.pipeline_mode<synchronous>, transform_indices = @transform_2, window_bounds = array<i64: 1, 128>}, {pipeline_mode = #tpu.pipeline_mode<synchronous>, transform_indices = @transform_3, window_bounds = array<i64: 128, 128>}, {pipeline_mode = #tpu.pipeline_mode<synchronous>, transform_indices = @transform_4, window_bounds = array<i64: 1, 128>}, {pipeline_mode = #tpu.pipeline_mode<synchronous>, transform_indices = @transform_5, window_bounds = array<i64: 8, 128>}]} {
    %c0 = arith.constant 0 : index
    %c0_0 = arith.constant 0 : index
    %0 = vector.load %arg1[%c0, %c0_0] : memref<8x128xf32, #tpu.memory_space<vmem>>, vector<8x128xf32>
    %c0_1 = arith.constant 0 : index
    %c0_2 = arith.constant 0 : index
    %1 = vector.load %arg2[%c0_1, %c0_2] : memref<128x128xf32, #tpu.memory_space<vmem>>, vector<128x128xf32>
    %cst = arith.constant dense<0.000000e+00> : vector<8x128xf32>
    %2 = tpu.matmul %0, %1, %cst {dimension_numbers = #tpu.dot_dimension_numbers<[1], [0], [0], [1], [0, 0, 1, 1], [], []>} : vector<8x128xf32>, vector<128x128xf32>, vector<8x128xf32> -> vector<8x128xf32>
    %c0_3 = arith.constant 0 : index
    %c0_4 = arith.constant 0 : index
    %3 = vector.load %arg3[%c0_3, %c0_4] : memref<1x128xf32, #tpu.memory_space<vmem>>, vector<1x128xf32>
    %4 = vector.broadcast %3 : vector<1x128xf32> to vector<8x128xf32>
    %5 = arith.addf %2, %4 : vector<8x128xf32>
    %cst_5 = arith.constant 0.000000e+00 : f32
    %6 = vector.broadcast %cst_5 : f32 to vector<8x128xf32>
    %7 = arith.maximumf %5, %6 : vector<8x128xf32>
    %c0_6 = arith.constant 0 : index
    %c0_7 = arith.constant 0 : index
    %8 = vector.load %arg4[%c0_6, %c0_7] : memref<128x128xf32, #tpu.memory_space<vmem>>, vector<128x128xf32>
    %cst_8 = arith.constant dense<0.000000e+00> : vector<8x128xf32>
    %9 = tpu.matmul %7, %8, %cst_8 {dimension_numbers = #tpu.dot_dimension_numbers<[1], [0], [0], [1], [0, 0, 1, 1], [], []>} : vector<8x128xf32>, vector<128x128xf32>, vector<8x128xf32> -> vector<8x128xf32>
    %c0_9 = arith.constant 0 : index
    %c0_10 = arith.constant 0 : index
    %10 = vector.load %arg5[%c0_9, %c0_10] : memref<1x128xf32, #tpu.memory_space<vmem>>, vector<1x128xf32>
    %11 = vector.broadcast %10 : vector<1x128xf32> to vector<8x128xf32>
    %12 = arith.addf %9, %11 : vector<8x128xf32>
    %c0_11 = arith.constant 0 : index
    %c0_12 = arith.constant 0 : index
    %13 = vector.load %arg6[%c0_11, %c0_12] : memref<8x128xf32, #tpu.memory_space<vmem>>, vector<8x128xf32>
    tpu.vector_store %arg6[%c0_11, %c0_12], %12 {strides = array<i32>} : memref<8x128xf32, #tpu.memory_space<vmem>>, vector<8x128xf32>,
    return
  }
  func.func @transform_0(%arg0: i32) -> (i32, i32) {
    %c0_i32 = arith.constant 0 : i32
    %c0_i32_0 = arith.constant 0 : i32
    %c0_i32_1 = arith.constant 0 : i32
    return %c0_i32, %c0_i32_0 : i32, i32
  }
  func.func @transform_1(%arg0: i32) -> (i32, i32) {
    %c0_i32 = arith.constant 0 : i32
    %c0_i32_0 = arith.constant 0 : i32
    %c0_i32_1 = arith.constant 0 : i32
    return %c0_i32, %c0_i32_0 : i32, i32
  }
  func.func @transform_2(%arg0: i32) -> (i32, i32) {
    %c0_i32 = arith.constant 0 : i32
    %c0_i32_0 = arith.constant 0 : i32
    %c0_i32_1 = arith.constant 0 : i32
    return %c0_i32, %c0_i32_0 : i32, i32
  }
  func.func @transform_3(%arg0: i32) -> (i32, i32) {
    %c0_i32 = arith.constant 0 : i32
    %c0_i32_0 = arith.constant 0 : i32
    %c0_i32_1 = arith.constant 0 : i32
    return %c0_i32, %c0_i32_0 : i32, i32
  }
  func.func @transform_4(%arg0: i32) -> (i32, i32) {
    %c0_i32 = arith.constant 0 : i32
    %c0_i32_0 = arith.constant 0 : i32
    %c0_i32_1 = arith.constant 0 : i32
    return %c0_i32, %c0_i32_0 : i32, i32
  }
  func.func @transform_5(%arg0: i32) -> (i32, i32) {
    %c0_i32 = arith.constant 0 : i32
    %c0_i32_0 = arith.constant 0 : i32
    %c0_i32_1 = arith.constant 0 : i32
    return %c0_i32, %c0_i32_0 : i32, i32
  }
}

module attributes {stable_mosaic.version = 11 : i64} {
  func.func @_conv_gap_kernel(%arg0: i32, %arg1: i32, %arg2: memref<1x1x128xf32, #tpu.memory_space<vmem>>, %arg3: memref<1x3x128xbf16, #tpu.memory_space<vmem>>, %arg4: memref<1x3x128xbf16, #tpu.memory_space<vmem>>, %arg5: memref<128x27xbf16, #tpu.memory_space<vmem>>, %arg6: memref<128x1xf32, #tpu.memory_space<vmem>>, %arg7: memref<1x128x1xf32, #tpu.memory_space<vmem>>, %arg8: memref<128x128xf32, #tpu.memory_space<vmem>>) attributes {dimension_semantics = [#tpu.dimension_semantics<parallel>, #tpu.dimension_semantics<arbitrary>], iteration_bounds = array<i64: 2, 3>, scalar_prefetch = 0 : i64, scratch_operands = 1 : i64, tpu.core_type = #tpu.core_type<tc>, window_params = [{transform_indices = @transform_0, window_bounds = array<i64: 1, 1, 128>}, {transform_indices = @transform_1, window_bounds = array<i64: 1, 3, 128>}, {transform_indices = @transform_2, window_bounds = array<i64: 1, 3, 128>}, {pipeline_mode = #tpu.pipeline_mode<synchronous>, transform_indices = @transform_3, window_bounds = array<i64: 128, 27>}, {pipeline_mode = #tpu.pipeline_mode<synchronous>, transform_indices = @transform_4, window_bounds = array<i64: 128, 1>}, {transform_indices = @transform_5, window_bounds = array<i64: 1, 128, 1>}]} {
    %c0_i32 = arith.constant 0 : i32
    %0 = arith.cmpi eq, %arg1, %c0_i32 : i32
    %1 = arith.extui %0 : i1 to i32
    %c0_i32_0 = arith.constant 0 : i32
    %2 = arith.cmpi ne, %1, %c0_i32_0 : i32
    scf.if %2 {
      %cst_28 = arith.constant 0.000000e+00 : f32
      %61 = vector.broadcast %cst_28 : f32 to vector<128x128xf32>
      %c0_29 = arith.constant 0 : index
      %c0_30 = arith.constant 0 : index
      %62 = vector.load %arg8[%c0_29, %c0_30] : memref<128x128xf32, #tpu.memory_space<vmem>>, vector<128x128xf32>
      tpu.vector_store %arg8[%c0_29, %c0_30], %61 {strides = array<i32>} : memref<128x128xf32, #tpu.memory_space<vmem>>, vector<128x128xf32>,
    } else {
    }
    %c0 = arith.constant 0 : index
    %c0_1 = arith.constant 0 : index
    %c0_2 = arith.constant 0 : index
    %3 = vector.load %arg3[%c0, %c0_1, %c0_2] : memref<1x3x128xbf16, #tpu.memory_space<vmem>>, vector<1x3x128xbf16>
    %4 = vector.shape_cast %3 : vector<1x3x128xbf16> to vector<3x128xbf16>
    %c0_3 = arith.constant 0 : index
    %c0_4 = arith.constant 0 : index
    %c0_5 = arith.constant 0 : index
    %5 = vector.load %arg4[%c0_3, %c0_4, %c0_5] : memref<1x3x128xbf16, #tpu.memory_space<vmem>>, vector<1x3x128xbf16>
    %6 = vector.shape_cast %5 : vector<1x3x128xbf16> to vector<3x128xbf16>
    %7 = tpu.concatenate %4, %6 in 1 : vector<3x128xbf16>, vector<3x128xbf16> -> vector<3x256xbf16>
    %c0_6 = arith.constant 0 : index
    %c0_7 = arith.constant 0 : index
    %8 = vector.load %arg5[%c0_6, %c0_7] : memref<128x27xbf16, #tpu.memory_space<vmem>>, vector<128x27xbf16>
    %cst = arith.constant 0.000000e+00 : f32
    %9 = vector.broadcast %cst : f32 to vector<128x128xf32>
    %10 = vector.extract_strided_slice %7 {offsets = [0, 0], sizes = [3, 128], strides = [1, 1]} : vector<3x256xbf16> to vector<3x128xbf16>
    %11 = vector.extract_strided_slice %8 {offsets = [0, 0], sizes = [128, 3], strides = [1, 1]} : vector<128x27xbf16> to vector<128x3xbf16>
    %cst_8 = arith.constant dense<0.000000e+00> : vector<128x128xf32>
    %12 = tpu.matmul %11, %10, %cst_8 {dimension_numbers = #tpu.dot_dimension_numbers<[1], [0], [0], [1], [0, 0, 1, 1], [], []>} : vector<128x3xbf16>, vector<3x128xbf16>, vector<128x128xf32> -> vector<128x128xf32>
    %13 = arith.addf %9, %12 : vector<128x128xf32>
    %14 = vector.extract_strided_slice %7 {offsets = [0, 1], sizes = [3, 128], strides = [1, 1]} : vector<3x256xbf16> to vector<3x128xbf16>
    %15 = vector.extract_strided_slice %8 {offsets = [0, 3], sizes = [128, 3], strides = [1, 1]} : vector<128x27xbf16> to vector<128x3xbf16>
    %cst_9 = arith.constant dense<0.000000e+00> : vector<128x128xf32>
    %16 = tpu.matmul %15, %14, %cst_9 {dimension_numbers = #tpu.dot_dimension_numbers<[1], [0], [0], [1], [0, 0, 1, 1], [], []>} : vector<128x3xbf16>, vector<3x128xbf16>, vector<128x128xf32> -> vector<128x128xf32>
    %17 = arith.addf %13, %16 : vector<128x128xf32>
    %18 = vector.extract_strided_slice %7 {offsets = [0, 2], sizes = [3, 128], strides = [1, 1]} : vector<3x256xbf16> to vector<3x128xbf16>
    %19 = vector.extract_strided_slice %8 {offsets = [0, 6], sizes = [128, 3], strides = [1, 1]} : vector<128x27xbf16> to vector<128x3xbf16>
    %cst_10 = arith.constant dense<0.000000e+00> : vector<128x128xf32>
    %20 = tpu.matmul %19, %18, %cst_10 {dimension_numbers = #tpu.dot_dimension_numbers<[1], [0], [0], [1], [0, 0, 1, 1], [], []>} : vector<128x3xbf16>, vector<3x128xbf16>, vector<128x128xf32> -> vector<128x128xf32>
    %21 = arith.addf %17, %20 : vector<128x128xf32>
    %22 = vector.extract_strided_slice %7 {offsets = [0, 18], sizes = [3, 128], strides = [1, 1]} : vector<3x256xbf16> to vector<3x128xbf16>
    %23 = vector.extract_strided_slice %8 {offsets = [0, 9], sizes = [128, 3], strides = [1, 1]} : vector<128x27xbf16> to vector<128x3xbf16>
    %cst_11 = arith.constant dense<0.000000e+00> : vector<128x128xf32>
    %24 = tpu.matmul %23, %22, %cst_11 {dimension_numbers = #tpu.dot_dimension_numbers<[1], [0], [0], [1], [0, 0, 1, 1], [], []>} : vector<128x3xbf16>, vector<3x128xbf16>, vector<128x128xf32> -> vector<128x128xf32>
    %25 = arith.addf %21, %24 : vector<128x128xf32>
    %26 = vector.extract_strided_slice %7 {offsets = [0, 19], sizes = [3, 128], strides = [1, 1]} : vector<3x256xbf16> to vector<3x128xbf16>
    %27 = vector.extract_strided_slice %8 {offsets = [0, 12], sizes = [128, 3], strides = [1, 1]} : vector<128x27xbf16> to vector<128x3xbf16>
    %cst_12 = arith.constant dense<0.000000e+00> : vector<128x128xf32>
    %28 = tpu.matmul %27, %26, %cst_12 {dimension_numbers = #tpu.dot_dimension_numbers<[1], [0], [0], [1], [0, 0, 1, 1], [], []>} : vector<128x3xbf16>, vector<3x128xbf16>, vector<128x128xf32> -> vector<128x128xf32>
    %29 = arith.addf %25, %28 : vector<128x128xf32>
    %30 = vector.extract_strided_slice %7 {offsets = [0, 20], sizes = [3, 128], strides = [1, 1]} : vector<3x256xbf16> to vector<3x128xbf16>
    %31 = vector.extract_strided_slice %8 {offsets = [0, 15], sizes = [128, 3], strides = [1, 1]} : vector<128x27xbf16> to vector<128x3xbf16>
    %cst_13 = arith.constant dense<0.000000e+00> : vector<128x128xf32>
    %32 = tpu.matmul %31, %30, %cst_13 {dimension_numbers = #tpu.dot_dimension_numbers<[1], [0], [0], [1], [0, 0, 1, 1], [], []>} : vector<128x3xbf16>, vector<3x128xbf16>, vector<128x128xf32> -> vector<128x128xf32>
    %33 = arith.addf %29, %32 : vector<128x128xf32>
    %34 = vector.extract_strided_slice %7 {offsets = [0, 36], sizes = [3, 128], strides = [1, 1]} : vector<3x256xbf16> to vector<3x128xbf16>
    %35 = vector.extract_strided_slice %8 {offsets = [0, 18], sizes = [128, 3], strides = [1, 1]} : vector<128x27xbf16> to vector<128x3xbf16>
    %cst_14 = arith.constant dense<0.000000e+00> : vector<128x128xf32>
    %36 = tpu.matmul %35, %34, %cst_14 {dimension_numbers = #tpu.dot_dimension_numbers<[1], [0], [0], [1], [0, 0, 1, 1], [], []>} : vector<128x3xbf16>, vector<3x128xbf16>, vector<128x128xf32> -> vector<128x128xf32>
    %37 = arith.addf %33, %36 : vector<128x128xf32>
    %38 = vector.extract_strided_slice %7 {offsets = [0, 37], sizes = [3, 128], strides = [1, 1]} : vector<3x256xbf16> to vector<3x128xbf16>
    %39 = vector.extract_strided_slice %8 {offsets = [0, 21], sizes = [128, 3], strides = [1, 1]} : vector<128x27xbf16> to vector<128x3xbf16>
    %cst_15 = arith.constant dense<0.000000e+00> : vector<128x128xf32>
    %40 = tpu.matmul %39, %38, %cst_15 {dimension_numbers = #tpu.dot_dimension_numbers<[1], [0], [0], [1], [0, 0, 1, 1], [], []>} : vector<128x3xbf16>, vector<3x128xbf16>, vector<128x128xf32> -> vector<128x128xf32>
    %41 = arith.addf %37, %40 : vector<128x128xf32>
    %42 = vector.extract_strided_slice %7 {offsets = [0, 38], sizes = [3, 128], strides = [1, 1]} : vector<3x256xbf16> to vector<3x128xbf16>
    %43 = vector.extract_strided_slice %8 {offsets = [0, 24], sizes = [128, 3], strides = [1, 1]} : vector<128x27xbf16> to vector<128x3xbf16>
    %cst_16 = arith.constant dense<0.000000e+00> : vector<128x128xf32>
    %44 = tpu.matmul %43, %42, %cst_16 {dimension_numbers = #tpu.dot_dimension_numbers<[1], [0], [0], [1], [0, 0, 1, 1], [], []>} : vector<128x3xbf16>, vector<3x128xbf16>, vector<128x128xf32> -> vector<128x128xf32>
    %45 = arith.addf %41, %44 : vector<128x128xf32>
    %c0_17 = arith.constant 0 : index
    %c0_18 = arith.constant 0 : index
    %46 = vector.load %arg6[%c0_17, %c0_18] : memref<128x1xf32, #tpu.memory_space<vmem>>, vector<128x1xf32>
    %47 = vector.broadcast %46 : vector<128x1xf32> to vector<128x128xf32>
    %48 = arith.addf %45, %47 : vector<128x128xf32>
    %cst_19 = arith.constant 0.000000e+00 : f32
    %49 = vector.broadcast %cst_19 : f32 to vector<128x128xf32>
    %50 = arith.maximumf %48, %49 : vector<128x128xf32>
    %c0_20 = arith.constant 0 : index
    %c0_21 = arith.constant 0 : index
    %c0_22 = arith.constant 0 : index
    %51 = vector.load %arg2[%c0_20, %c0_21, %c0_22] : memref<1x1x128xf32, #tpu.memory_space<vmem>>, vector<1x1x128xf32>
    %52 = vector.shape_cast %51 : vector<1x1x128xf32> to vector<1x128xf32>
    %53 = vector.broadcast %52 : vector<1x128xf32> to vector<128x128xf32>
    %54 = arith.mulf %50, %53 : vector<128x128xf32>
    %c0_23 = arith.constant 0 : index
    %c0_24 = arith.constant 0 : index
    %55 = vector.load %arg8[%c0_23, %c0_24] : memref<128x128xf32, #tpu.memory_space<vmem>>, vector<128x128xf32>
    %56 = arith.addf %55, %54 : vector<128x128xf32>
    %c0_25 = arith.constant 0 : index
    %c0_26 = arith.constant 0 : index
    %57 = vector.load %arg8[%c0_25, %c0_26] : memref<128x128xf32, #tpu.memory_space<vmem>>, vector<128x128xf32>
    tpu.vector_store %arg8[%c0_25, %c0_26], %56 {strides = array<i32>} : memref<128x128xf32, #tpu.memory_space<vmem>>, vector<128x128xf32>,
    %c2_i32 = arith.constant 2 : i32
    %58 = arith.cmpi eq, %arg1, %c2_i32 : i32
    %59 = arith.extui %58 : i1 to i32
    %c0_i32_27 = arith.constant 0 : i32
    %60 = arith.cmpi ne, %59, %c0_i32_27 : i32
    scf.if %60 {
      %c0_28 = arith.constant 0 : index
      %c0_29 = arith.constant 0 : index
      %61 = vector.load %arg8[%c0_28, %c0_29] : memref<128x128xf32, #tpu.memory_space<vmem>>, vector<128x128xf32>
      %cst_30 = arith.constant dense<0.000000e+00> : vector<128xf32>
      %62 = vector.multi_reduction <add>, %61, %cst_30 [1] : vector<128x128xf32> to vector<128xf32>
      %63 = vector.shape_cast %62 : vector<128xf32> to vector<128x1xf32>
      %cst_31 = arith.constant 3.906250e-03 : f32
      %64 = vector.broadcast %cst_31 : f32 to vector<128x1xf32>
      %65 = arith.mulf %63, %64 : vector<128x1xf32>
      %c0_32 = arith.constant 0 : index
      %c0_33 = arith.constant 0 : index
      %c0_34 = arith.constant 0 : index
      %66 = vector.load %arg7[%c0_32, %c0_33, %c0_34] : memref<1x128x1xf32, #tpu.memory_space<vmem>>, vector<1x128x1xf32>
      %67 = vector.shape_cast %66 : vector<1x128x1xf32> to vector<128x1xf32>
      %68 = vector.shape_cast %65 : vector<128x1xf32> to vector<1x128x1xf32>
      tpu.vector_store %arg7[%c0_32, %c0_33, %c0_34], %68 {strides = array<i32>} : memref<1x128x1xf32, #tpu.memory_space<vmem>>, vector<1x128x1xf32>,
    } else {
    }
    return
  }
  func.func @transform_0(%arg0: i32, %arg1: i32) -> (i32, i32, i32) {
    %c0_i32 = arith.constant 0 : i32
    %c0_i32_0 = arith.constant 0 : i32
    %c0_i32_1 = arith.constant 0 : i32
    return %arg1, %c0_i32, %c0_i32_0 : i32, i32, i32
  }
  func.func @transform_1(%arg0: i32, %arg1: i32) -> (i32, i32, i32) {
    %c0_i32 = arith.constant 0 : i32
    %c0_i32_0 = arith.constant 0 : i32
    return %arg0, %c0_i32, %arg1 : i32, i32, i32
  }
  func.func @transform_2(%arg0: i32, %arg1: i32) -> (i32, i32, i32) {
    %c1_i32 = arith.constant 1 : i32
    %0 = arith.addi %arg1, %c1_i32 : i32
    %c0_i32 = arith.constant 0 : i32
    %c0_i32_0 = arith.constant 0 : i32
    return %arg0, %c0_i32, %0 : i32, i32, i32
  }
  func.func @transform_3(%arg0: i32, %arg1: i32) -> (i32, i32) {
    %c0_i32 = arith.constant 0 : i32
    %c0_i32_0 = arith.constant 0 : i32
    %c0_i32_1 = arith.constant 0 : i32
    return %c0_i32, %c0_i32_0 : i32, i32
  }
  func.func @transform_4(%arg0: i32, %arg1: i32) -> (i32, i32) {
    %c0_i32 = arith.constant 0 : i32
    %c0_i32_0 = arith.constant 0 : i32
    %c0_i32_1 = arith.constant 0 : i32
    return %c0_i32, %c0_i32_0 : i32, i32
  }
  func.func @transform_5(%arg0: i32, %arg1: i32) -> (i32, i32, i32) {
    %c0_i32 = arith.constant 0 : i32
    %c0_i32_0 = arith.constant 0 : i32
    %c0_i32_1 = arith.constant 0 : i32
    return %arg0, %c0_i32, %c0_i32_0 : i32, i32, i32
  }
}

</mosaic_0001>

<llo_original>
// kernel: animal_model_forward.3
$region0: #{animal_model_forward.3}
  #allocation0 [shape = 'u32[]', space=smem, size = 0x4, offset = 0x4, fixed_abs, tag = 'smem constant byte address 0x4 - core index']
  #allocation1 [shape = 'u32[144,128]{1,0:T(1,128)}', space=vmem, size = 0x12000, scoped, tag = 'internal scratch']
  %s0 = inlined_call_operand.vmem [shape: f32[8,128], index: 0, kind: input, shape index: {}]
  %s1 = inlined_call_operand.vmem [shape: f32[128,128], index: 1, kind: input, shape index: {}]
  %s2 = inlined_call_operand.vmem [shape: f32[1,128], index: 2, kind: input, shape index: {}]
  %s3 = inlined_call_operand.vmem [shape: f32[128,128], index: 3, kind: input, shape index: {}]
  %s4 = inlined_call_operand.vmem [shape: f32[1,128], index: 4, kind: input, shape index: {}]
  %s5 = inlined_call_operand.vmem [shape: f32[8,128], index: 5, kind: output, shape index: {}]
  %s6 = sld [smem:[#allocation0]]
  $region30: #{animal_model_forward.3} parent=0
    _
  %s8 = ssub.s32 1, %s6
  %s9 = scalar_select 0, %s8, %s6
  // Predicated region
  $region2: #{animal_model_forward.3} parent=0 // pred_check
    _
  $region3: #{animal_model_forward.3} parent=0 // pred_check_branch
    %11 = sbr.rel (0) target = $region5
  $region4: #{animal_model_forward.3} parent=0 // pred_region
    _
  $region5: #{animal_model_forward.3} parent=0 // pred_fallthru
    _
  // Predicated region
  $region6: #{animal_model_forward.3} parent=0 // pred_check
    _
  $region7: #{animal_model_forward.3} parent=0 // pred_check_branch
    %13 = sbr.rel (0) target = $region9
  $region8: #{animal_model_forward.3} parent=0 // pred_region
    _
  $region9: #{animal_model_forward.3} parent=0 // pred_fallthru
    _
  // Predicated region
  $region10: #{animal_model_forward.3} parent=0 // pred_check
    _
  $region11: #{animal_model_forward.3} parent=0 // pred_check_branch
    %15 = sbr.rel (0) target = $region13
  $region12: #{animal_model_forward.3} parent=0 // pred_region
    _
  $region13: #{animal_model_forward.3} parent=0 // pred_fallthru
    _
  // Predicated region
  $region14: #{animal_model_forward.3} parent=0 // pred_check
    _
  $region15: #{animal_model_forward.3} parent=0 // pred_check_branch
    %17 = sbr.rel (0) target = $region17
  $region16: #{animal_model_forward.3} parent=0 // pred_region
    _
  $region17: #{animal_model_forward.3} parent=0 // pred_fallthru
    _
  // Predicated region
  $region18: #{animal_model_forward.3} parent=0 // pred_check
    _
  $region19: #{animal_model_forward.3} parent=0 // pred_check_branch
    %19 = sbr.rel (0) target = $region21
  $region20: #{animal_model_forward.3} parent=0 // pred_region
    _
  $region21: #{animal_model_forward.3} parent=0 // pred_fallthru
    _
  %v20 = vld [vmem:[%s0] sm:$0xff]
  %v21 = vld [vmem:[%s1] sm:$0xff]
  %v22 = vld [vmem:[%s1 + $0x8] sm:$0xff]
  %v23 = vld [vmem:[%s1 + $0x10] sm:$0xff]
  %v24 = vld [vmem:[%s1 + $0x18] sm:$0xff]
  %v25 = vld [vmem:[%s1 + $0x20] sm:$0xff]
  %v26 = vld [vmem:[%s1 + $0x28] sm:$0xff]
  %v27 = vld [vmem:[%s1 + $0x30] sm:$0xff]
  %v28 = vld [vmem:[%s1 + $0x38] sm:$0xff]
  %v29 = vld [vmem:[%s1 + $0x40] sm:$0xff]
  %v30 = vld [vmem:[%s1 + $0x48] sm:$0xff]
  %v31 = vld [vmem:[%s1 + $0x50] sm:$0xff]
  %v32 = vld [vmem:[%s1 + $0x58] sm:$0xff]
  %v33 = vld [vmem:[%s1 + $0x60] sm:$0xff]
  %v34 = vld [vmem:[%s1 + $0x68] sm:$0xff]
  %v35 = vld [vmem:[%s1 + $0x70] sm:$0xff]
  %v36 = vld [vmem:[%s1 + $0x78] sm:$0xff]
  %v37 = vld [vmem:[%s2] sm:$0x1]
  %v39 = vlaneseq
  %v40 = vshrl.u32 %v39, 7
  %v41 = vsub.s32 0, %v40
  %v42 = vrot.slane %v37, %v41
  %44 = vmatprep.subr.mxu0 0.0
  %45 = vmatpush1.msra.mxu0 %v21
  %46 = vmatprep.subr.mxu0 0.0
  %47 = vmatpush1.msra.mxu0 %v22
  %48 = vmatprep.subr.mxu0 0.0
  %49 = vmatpush1.msra.mxu0 %v23
  %50 = vmatprep.subr.mxu0 0.0
  %51 = vmatpush1.msra.mxu0 %v24
  %52 = vmatprep.subr.mxu0 0.0
  %53 = vmatpush1.msra.mxu0 %v25
  %54 = vmatprep.subr.mxu0 0.0
  %55 = vmatpush1.msra.mxu0 %v26
  %56 = vmatprep.subr.mxu0 0.0
  %57 = vmatpush1.msra.mxu0 %v27
  %58 = vmatprep.subr.mxu0 0.0
  %59 = vmatpush1.msra.mxu0 %v28
  %60 = vmatprep.subr.mxu0 0.0
  %61 = vmatpush1.msra.mxu0 %v29
  %62 = vmatprep.subr.mxu0 0.0
  %63 = vmatpush1.msra.mxu0 %v30
  %64 = vmatprep.subr.mxu0 0.0
  %65 = vmatpush1.msra.mxu0 %v31
  %66 = vmatprep.subr.mxu0 0.0
  %67 = vmatpush1.msra.mxu0 %v32
  %68 = vmatprep.subr.mxu0 0.0
  %69 = vmatpush1.msra.mxu0 %v33
  %70 = vmatprep.subr.mxu0 0.0
  %71 = vmatpush1.msra.mxu0 %v34
  %72 = vmatprep.subr.mxu0 0.0
  %73 = vmatpush1.msra.mxu0 %v35
  %74 = vmatprep.subr.mxu0 0.0
  %75 = vmatpush1.msra.mxu0 %v36
  %76 = vmatprep.subr.mxu0 0.0
  %77 = vmatpush1.msra.mxu0 0.0
  %78 = vmatprep.subr.mxu0 0.0
  %79 = vmatpush1.msra.mxu0 0.0
  %80 = vmatprep.subr.mxu0 0.0
  %81 = vmatpush1.msra.mxu0 0.0
  %82 = vmatprep.subr.mxu0 0.0
  %83 = vmatpush1.msra.mxu0 0.0
  %84 = vmatprep.subr.mxu0 0.0
  %85 = vmatpush1.msra.mxu0 0.0
  %86 = vmatprep.subr.mxu0 0.0
  %87 = vmatpush1.msra.mxu0 0.0
  %88 = vmatprep.subr.mxu0 0.0
  %89 = vmatpush1.msra.mxu0 0.0
  %90 = vmatprep.subr.mxu0 0.0
  %91 = vmatpush1.msra.mxu0 0.0
  %92 = vmatprep.subr.mxu0 0.0
  %93 = vmatpush1.msra.mxu0 0.0
  %94 = vmatprep.subr.mxu0 0.0
  %95 = vmatpush1.msra.mxu0 0.0
  %96 = vmatprep.subr.mxu0 0.0
  %97 = vmatpush1.msra.mxu0 0.0
  %98 = vmatprep.subr.mxu0 0.0
  %99 = vmatpush1.msra.mxu0 0.0
  %100 = vmatprep.subr.mxu0 0.0
  %101 = vmatpush1.msra.mxu0 0.0
  %102 = vmatprep.subr.mxu0 0.0
  %103 = vmatpush1.msra.mxu0 0.0
  %104 = vmatprep.subr.mxu0 0.0
  %105 = vmatpush1.msra.mxu0 0.0
  %106 = vmatprep.subr.mxu0 0.0
  %107 = vmatpush1.msra.mxu0 0.0
  %108 = vmatprep.mubr.f32.mxu0 0.0
  %109 = vmatmul.mubr.f32.gmra.mrb[0].mxu0 %v20
  %v110 = vpop.f32.mrb[0].mxu0
  %v111 = vadd.f32 %v42, %v110
  %v112 = vpop.f32.mrb[0].mxu0
  %113 = vdwg.mxu0
  %v114 = vmax.f32 %v111, 0.0
  %v115 = vld [vmem:[%s3] sm:$0xff]
  %v116 = vld [vmem:[%s3 + $0x8] sm:$0xff]
  %v117 = vld [vmem:[%s3 + $0x10] sm:$0xff]
  %v118 = vld [vmem:[%s3 + $0x18] sm:$0xff]
  %v119 = vld [vmem:[%s3 + $0x20] sm:$0xff]
  %v120 = vld [vmem:[%s3 + $0x28] sm:$0xff]
  %v121 = vld [vmem:[%s3 + $0x30] sm:$0xff]
  %v122 = vld [vmem:[%s3 + $0x38] sm:$0xff]
  %v123 = vld [vmem:[%s3 + $0x40] sm:$0xff]
  %v124 = vld [vmem:[%s3 + $0x48] sm:$0xff]
  %v125 = vld [vmem:[%s3 + $0x50] sm:$0xff]
  %v126 = vld [vmem:[%s3 + $0x58] sm:$0xff]
  %v127 = vld [vmem:[%s3 + $0x60] sm:$0xff]
  %v128 = vld [vmem:[%s3 + $0x68] sm:$0xff]
  %v129 = vld [vmem:[%s3 + $0x70] sm:$0xff]
  %v130 = vld [vmem:[%s3 + $0x78] sm:$0xff]
  %v131 = vld [vmem:[%s4] sm:$0x1]
  %v133 = vlaneseq
  %v134 = vshrl.u32 %v133, 7
  %v135 = vsub.s32 0, %v134
  %v136 = vrot.slane %v131, %v135
  %138 = vmatprep.subr.mxu0 0.0
  %139 = vmatpush1.msra.mxu0 %v115
  %140 = vmatprep.subr.mxu0 0.0
  %141 = vmatpush1.msra.mxu0 %v116
  %142 = vmatprep.subr.mxu0 0.0
  %143 = vmatpush1.msra.mxu0 %v117
  %144 = vmatprep.subr.mxu0 0.0
  %145 = vmatpush1.msra.mxu0 %v118
  %146 = vmatprep.subr.mxu0 0.0
  %147 = vmatpush1.msra.mxu0 %v119
  %148 = vmatprep.subr.mxu0 0.0
  %149 = vmatpush1.msra.mxu0 %v120
  %150 = vmatprep.subr.mxu0 0.0
  %151 = vmatpush1.msra.mxu0 %v121
  %152 = vmatprep.subr.mxu0 0.0
  %153 = vmatpush1.msra.mxu0 %v122
  %154 = vmatprep.subr.mxu0 0.0
  %155 = vmatpush1.msra.mxu0 %v123
  %156 = vmatprep.subr.mxu0 0.0
  %157 = vmatpush1.msra.mxu0 %v124
  %158 = vmatprep.subr.mxu0 0.0
  %159 = vmatpush1.msra.mxu0 %v125
  %160 = vmatprep.subr.mxu0 0.0
  %161 = vmatpush1.msra.mxu0 %v126
  %162 = vmatprep.subr.mxu0 0.0
  %163 = vmatpush1.msra.mxu0 %v127
  %164 = vmatprep.subr.mxu0 0.0
  %165 = vmatpush1.msra.mxu0 %v128
  %166 = vmatprep.subr.mxu0 0.0
  %167 = vmatpush1.msra.mxu0 %v129
  %168 = vmatprep.subr.mxu0 0.0
  %169 = vmatpush1.msra.mxu0 %v130
  %170 = vmatprep.subr.mxu0 0.0
  %171 = vmatpush1.msra.mxu0 0.0
  %172 = vmatprep.subr.mxu0 0.0
  %173 = vmatpush1.msra.mxu0 0.0
  %174 = vmatprep.subr.mxu0 0.0
  %175 = vmatpush1.msra.mxu0 0.0
  %176 = vmatprep.subr.mxu0 0.0
  %177 = vmatpush1.msra.mxu0 0.0
  %178 = vmatprep.subr.mxu0 0.0
  %179 = vmatpush1.msra.mxu0 0.0
  %180 = vmatprep.subr.mxu0 0.0
  %181 = vmatpush1.msra.mxu0 0.0
  %182 = vmatprep.subr.mxu0 0.0
  %183 = vmatpush1.msra.mxu0 0.0
  %184 = vmatprep.subr.mxu0 0.0
  %185 = vmatpush1.msra.mxu0 0.0
  %186 = vmatprep.subr.mxu0 0.0
  %187 = vmatpush1.msra.mxu0 0.0
  %188 = vmatprep.subr.mxu0 0.0
  %189 = vmatpush1.msra.mxu0 0.0
  %190 = vmatprep.subr.mxu0 0.0
  %191 = vmatpush1.msra.mxu0 0.0
  %192 = vmatprep.subr.mxu0 0.0
  %193 = vmatpush1.msra.mxu0 0.0
  %194 = vmatprep.subr.mxu0 0.0
  %195 = vmatpush1.msra.mxu0 0.0
  %196 = vmatprep.subr.mxu0 0.0
  %197 = vmatpush1.msra.mxu0 0.0
  %198 = vmatprep.subr.mxu0 0.0
  %199 = vmatpush1.msra.mxu0 0.0
  %200 = vmatprep.subr.mxu0 0.0
  %201 = vmatpush1.msra.mxu0 0.0
  %202 = vmatprep.mubr.f32.mxu0 0.0
  %203 = vmatmul.mubr.f32.gmra.mrb[0].mxu0 %v114
  %v204 = vpop.f32.mrb[0].mxu0
  %v205 = vadd.f32 %v136, %v204
  %v206 = vpop.f32.mrb[0].mxu0
  %207 = vdwg.mxu0
  %208 = vst [vmem:[%s5] sm:$0xff] %v205
  // Predicated region
  $region22: #{animal_model_forward.3} parent=0 // pred_check
    _
  $region23: #{animal_model_forward.3} parent=0 // pred_check_branch
    %210 = sbr.rel (0) target = $region25
  $region24: #{animal_model_forward.3} parent=0 // pred_region
    _
  $region25: #{animal_model_forward.3} parent=0 // pred_fallthru
    _
  // Predicated region
  $region26: #{animal_model_forward.3} parent=0 // pred_check
    _
  $region27: #{animal_model_forward.3} parent=0 // pred_check_branch
    %212 = sbr.rel (0) target = $region29
  $region28: #{animal_model_forward.3} parent=0 // pred_region
    _
  $region29: #{animal_model_forward.3} parent=0 // pred_fallthru
    _

// kernel: animal_model_forward.2
$region0: #{animal_model_forward.2}
  #allocation0 [shape = 'u32[]', space=smem, size = 0x4, offset = 0x4, fixed_abs, tag = 'smem constant byte address 0x4 - core index']
  #allocation1 [shape = 'u32[144,128]{1,0:T(1,128)}', space=vmem, size = 0x12000, scoped, tag = 'internal scratch']
  #allocation2 [shape = 'f32[128,128]{1,0:T(8,128)}', space=vmem, size = 0x10000, scoped, tag = 'scratch operand']
  %s0 = inlined_call_operand.vmem [shape: f32[3,1,128], index: 0, kind: input, shape index: {}]
  %s1 = inlined_call_operand.vmem [shape: bf16[2,3,512], index: 1, kind: input, shape index: {}, may-alias: {1,2}]
  %s2 = inlined_call_operand.vmem [shape: bf16[2,3,512], index: 2, kind: input, shape index: {}, may-alias: {1,2}]
  %s3 = inlined_call_operand.vmem [shape: bf16[128,27], index: 3, kind: input, shape index: {}]
  %s4 = inlined_call_operand.vmem [shape: f32[128,1], index: 4, kind: input, shape index: {}]
  %s5 = inlined_call_operand.vmem [shape: f32[2,128,1], index: 5, kind: output, shape index: {}]
  %s6 = sld [smem:[#allocation0]]
  $region61: #{animal_model_forward.2} parent=0
    _
  %s8 = ssub.s32 1, %s6
  %s9 = scalar_select 0, %s8, %s6
  loop: start=0, step=1, limit=8
  $region2: #{animal_model_forward.2} parent=0 // loop_pre_header
    _
  $region3: #{animal_model_forward.2} parent=0 // loop_header
    %s11 = sphi 0, %s15
    %p12 = scmp.ge.s32.totalorder %s11, 8
    %s18 = sphi 0, %s30
    %s19 = sphi 0, %s26
    %s20 = sphi 0, %s18
    %s21 = sphi 0, %s19
    %s22 = sphi 0, %s20
    %s23 = sphi 0, %s21
    %s33 = sphi 0, %s35
    %s36 = sphi 0, %s33
    %s37 = sphi 0, %s36
    %s53 = sphi 0, %s37
    %s61 = sphi 0, %s63
    %s64 = sphi 0, %s61
    %s65 = sphi 0, %s64
    %s81 = sphi 0, %s65
    %s91 = sphi 0, %s93
    %s94 = sphi 0, %s91
    %s95 = sphi 0, %s94
    %s111 = sphi 0, %s95
    %s115 = sphi 0, %s115
    %s117 = sphi 0, %s115
    %s118 = sphi 0, %s117
    %s132 = sphi 0, %s118
    %s136 = sphi 0, %s136
    %s138 = sphi 0, %s136
    %s139 = sphi 0, %s138
    %s153 = sphi 0, %s139
    %s159 = sphi 0, %s161
    %s162 = sphi 0, %s159
    %s163 = sphi 0, %s162
    %s179 = sphi 0, %s163
  $region4: #{animal_model_forward.2} parent=0 // loop_header_branch
    %14 = sbr.rel (%p12) target = $region8
  $region5: #{animal_model_forward.2} parent=0 // loop_body
    %s16 = ssub.s32 %s11, 1
    %s17 = ssub.s32 %s11, 2
    %s24 = sadd.s32 1, %s19
    %p25 = scmp.ge.s32.totalorder %s24, 3
    %s26 = scalar_select %p25, 0, %s24
    %s27 = sadd.s32 1, %s18
    %s28 = scalar_select %p25, %s27, %s18
    %p29 = scmp.ge.s32.totalorder %s28, 2
    %s30 = scalar_select %p29, 0, %s28
    %s31 = ssub.s32 %s19, %s26
    %p32 = scmp.eq.s32.totalorder %s31, 0
    %s34 = sadd.s32 %s33, 1
    %s35 = scalar_select %p32, %s33, %s34
    %p38 = pneg %p32
    %p39 = scmp.eq.s32.totalorder %s11, 5
    %p40 = por %p38, %p39
    %p41 = scmp.ne.s32.totalorder %s33, %s36
    %p42 = scmp.eq.s32.totalorder %s11, 0
    %p43 = por %p41, %p42
    %p44 = scmp.ne.s32.totalorder %s33, %s36
    %p45 = scmp.eq.s32.totalorder %s16, 5
    %p46 = por %p44, %p45
    %p47 = scmp.ne.s32.totalorder %s36, %s37
    %p48 = scmp.eq.s32.totalorder %s16, 0
    %p49 = por %p47, %p48
    %p50 = scmp.ne.s32.totalorder %s36, %s37
    %p51 = scmp.eq.s32.totalorder %s17, 5
    %p52 = por %p50, %p51
    %p54 = scmp.ne.s32.totalorder %s37, %s53
    %p55 = scmp.eq.s32.totalorder %s17, 0
    %p56 = por %p54, %p55
    %s57 = ssub.s32 %s18, %s30
    %s58 = ssub.s32 %s19, %s26
    %s59 = sor.u32 %s57, %s58
    %p60 = scmp.eq.s32.totalorder %s59, 0
    %s62 = sadd.s32 %s61, 1
    %s63 = scalar_select %p60, %s61, %s62
    %p66 = pneg %p60
    %p67 = scmp.eq.s32.totalorder %s11, 5
    %p68 = por %p66, %p67
    %p69 = scmp.ne.s32.totalorder %s61, %s64
    %p70 = scmp.eq.s32.totalorder %s11, 0
    %p71 = por %p69, %p70
    %p72 = scmp.ne.s32.totalorder %s61, %s64
    %p73 = scmp.eq.s32.totalorder %s16, 5
    %p74 = por %p72, %p73
    %p75 = scmp.ne.s32.totalorder %s64, %s65
    %p76 = scmp.eq.s32.totalorder %s16, 0
    %p77 = por %p75, %p76
    %p78 = scmp.ne.s32.totalorder %s64, %s65
    %p79 = scmp.eq.s32.totalorder %s17, 5
    %p80 = por %p78, %p79
    %p82 = scmp.ne.s32.totalorder %s65, %s81
    %p83 = scmp.eq.s32.totalorder %s17, 0
    %p84 = por %p82, %p83
    %s85 = sadd.s32 %s19, 1
    %s86 = sadd.s32 %s26, 1
    %s87 = ssub.s32 %s18, %s30
    %s88 = ssub.s32 %s85, %s86
    %s89 = sor.u32 %s87, %s88
    %p90 = scmp.eq.s32.totalorder %s89, 0
    %s92 = sadd.s32 %s91, 1
    %s93 = scalar_select %p90, %s91, %s92
    %p96 = pneg %p90
    %p97 = scmp.eq.s32.totalorder %s11, 5
    %p98 = por %p96, %p97
    %p99 = scmp.ne.s32.totalorder %s91, %s94
    %p100 = scmp.eq.s32.totalorder %s11, 0
    %p101 = por %p99, %p100
    %p102 = scmp.ne.s32.totalorder %s91, %s94
    %p103 = scmp.eq.s32.totalorder %s16, 5
    %p104 = por %p102, %p103
    %p105 = scmp.ne.s32.totalorder %s94, %s95
    %p106 = scmp.eq.s32.totalorder %s16, 0
    %p107 = por %p105, %p106
    %p108 = scmp.ne.s32.totalorder %s94, %s95
    %p109 = scmp.eq.s32.totalorder %s17, 5
    %p110 = por %p108, %p109
    %p112 = scmp.ne.s32.totalorder %s95, %s111
    %p113 = scmp.eq.s32.totalorder %s17, 0
    %p114 = por %p112, %p113
    %s116 = sadd.s32 %s115, 1
    %p119 = scmp.eq.s32.totalorder %s11, 5
    %p120 = scmp.ne.s32.totalorder %s115, %s117
    %p121 = scmp.eq.s32.totalorder %s11, 0
    %p122 = por %p120, %p121
    %p123 = scmp.ne.s32.totalorder %s115, %s117
    %p124 = scmp.eq.s32.totalorder %s16, 5
    %p125 = por %p123, %p124
    %p126 = scmp.ne.s32.totalorder %s117, %s118
    %p127 = scmp.eq.s32.totalorder %s16, 0
    %p128 = por %p126, %p127
    %p129 = scmp.ne.s32.totalorder %s117, %s118
    %p130 = scmp.eq.s32.totalorder %s17, 5
    %p131 = por %p129, %p130
    %p133 = scmp.ne.s32.totalorder %s118, %s132
    %p134 = scmp.eq.s32.totalorder %s17, 0
    %p135 = por %p133, %p134
    %s137 = sadd.s32 %s136, 1
    %p140 = scmp.eq.s32.totalorder %s11, 5
    %p141 = scmp.ne.s32.totalorder %s136, %s138
    %p142 = scmp.eq.s32.totalorder %s11, 0
    %p143 = por %p141, %p142
    %p144 = scmp.ne.s32.totalorder %s136, %s138
    %p145 = scmp.eq.s32.totalorder %s16, 5
    %p146 = por %p144, %p145
    %p147 = scmp.ne.s32.totalorder %s138, %s139
    %p148 = scmp.eq.s32.totalorder %s16, 0
    %p149 = por %p147, %p148
    %p150 = scmp.ne.s32.totalorder %s138, %s139
    %p151 = scmp.eq.s32.totalorder %s17, 5
    %p152 = por %p150, %p151
    %p154 = scmp.ne.s32.totalorder %s139, %s153
    %p155 = scmp.eq.s32.totalorder %s17, 0
    %p156 = por %p154, %p155
    %s157 = ssub.s32 %s18, %s30
    %p158 = scmp.eq.s32.totalorder %s157, 0
    %s160 = sadd.s32 %s159, 1
    %s161 = scalar_select %p158, %s159, %s160
    %p164 = pneg %p158
    %p165 = scmp.eq.s32.totalorder %s11, 5
    %p166 = por %p164, %p165
    %p167 = scmp.ne.s32.totalorder %s159, %s162
    %p168 = scmp.eq.s32.totalorder %s11, 0
    %p169 = por %p167, %p168
    %p170 = scmp.ne.s32.totalorder %s159, %s162
    %p171 = scmp.eq.s32.totalorder %s16, 5
    %p172 = por %p170, %p171
    %p173 = scmp.ne.s32.totalorder %s162, %s163
    %p174 = scmp.eq.s32.totalorder %s16, 0
    %p175 = por %p173, %p174
    %p176 = scmp.ne.s32.totalorder %s162, %s163
    %p177 = scmp.eq.s32.totalorder %s17, 5
    %p178 = por %p176, %p177
    %p180 = scmp.ne.s32.totalorder %s163, %s179
    %p181 = scmp.eq.s32.totalorder %s17, 0
    %p182 = por %p180, %p181
    %p183 = scmp.le.s32.totalorder 1, %s11
    %p184 = scmp.lt.s32.totalorder %s11, 7
    %p185 = pnand %p183, %p184
    %p186 = pneg %p185
    // Predicated region
    $region9: #{animal_model_forward.2} parent=5 // pred_check
      _
    $region10: #{animal_model_forward.2} parent=5 // pred_check_branch
      %188 = sbr.rel (%p185) target = $region12
    $region11: #{animal_model_forward.2} parent=5 // pred_region
      %s189 = ssub.s32 %s11, 1
      // Predicated region
      $region13: #{animal_model_forward.2} parent=11 // pred_check
        %p190 = pneg %p128
      $region14: #{animal_model_forward.2} parent=11 // pred_check_branch
        %192 = sbr.rel (%p190) target = $region16
      $region15: #{animal_model_forward.2} parent=11 // pred_region
        _
      $region16: #{animal_model_forward.2} parent=11 // pred_fallthru
        _
      // Predicated region
      $region17: #{animal_model_forward.2} parent=11 // pred_check
        %p193 = pneg %p149
      $region18: #{animal_model_forward.2} parent=11 // pred_check_branch
        %195 = sbr.rel (%p193) target = $region20
      $region19: #{animal_model_forward.2} parent=11 // pred_region
        _
      $region20: #{animal_model_forward.2} parent=11 // pred_fallthru
        _
    $region12: #{animal_model_forward.2} parent=5 // pred_fallthru
      _
    %p196 = scmp.lt.s32.totalorder %s11, 6
    // Predicated region
    $region21: #{animal_model_forward.2} parent=5 // pred_check
      %p197 = pneg %p196
    $region22: #{animal_model_forward.2} parent=5 // pred_check_branch
      %199 = sbr.rel (%p197) target = $region24
    $region23: #{animal_model_forward.2} parent=5 // pred_region
      // Predicated region
      $region25: #{animal_model_forward.2} parent=23 // pred_check
        %p200 = pneg %p43
      $region26: #{animal_model_forward.2} parent=23 // pred_check_branch
        %202 = sbr.rel (%p200) target = $region28
      $region27: #{animal_model_forward.2} parent=23 // pred_region
        %p203 = scmp.lt.s32.totalorder %s19, 2
        %s204 = scalar_select %p203, %s19, 2
        %s205 = scalar_lea.vmem %s0, %s204
      $region28: #{animal_model_forward.2} parent=23 // pred_fallthru
        _
      // Predicated region
      $region29: #{animal_model_forward.2} parent=23 // pred_check
        %p206 = pneg %p71
      $region30: #{animal_model_forward.2} parent=23 // pred_check_branch
        %208 = sbr.rel (%p206) target = $region32
      $region31: #{animal_model_forward.2} parent=23 // pred_region
        %p209 = scmp.lt.s32.totalorder %s18, 1
        %s210 = scalar_select %p209, %s18, 1
        %p211 = scmp.lt.s32.totalorder %s19, 3
        %s212 = scalar_select %p211, %s19, 3
        %s213 = smul.addr %s210, 4
        %s214 = sadd.s32 %s212, %s213
        %s215 = smul.addr %s214, 2
        %s216 = scalar_lea.vmem %s1, %s215
      $region32: #{animal_model_forward.2} parent=23 // pred_fallthru
        _
      // Predicated region
      $region33: #{animal_model_forward.2} parent=23 // pred_check
        %p217 = pneg %p101
      $region34: #{animal_model_forward.2} parent=23 // pred_check_branch
        %219 = sbr.rel (%p217) target = $region36
      $region35: #{animal_model_forward.2} parent=23 // pred_region
        %s220 = sadd.s32 %s19, 1
        %p221 = scmp.lt.s32.totalorder %s18, 1
        %s222 = scalar_select %p221, %s18, 1
        %p223 = scmp.lt.s32.totalorder %s220, 3
        %s224 = scalar_select %p223, %s220, 3
        %s225 = smul.addr %s222, 4
        %s226 = sadd.s32 %s224, %s225
        %s227 = smul.addr %s226, 2
        %s228 = scalar_lea.vmem %s2, %s227
        %s229 = sadd.s32 %s19, 1
      $region36: #{animal_model_forward.2} parent=23 // pred_fallthru
        _
    $region24: #{animal_model_forward.2} parent=5 // pred_fallthru
      _
    %p230 = scmp.le.s32.totalorder 1, %s11
    %p231 = scmp.lt.s32.totalorder %s11, 7
    %p232 = pnand %p230, %p231
    %p233 = pneg %p232
    // Predicated region
    $region37: #{animal_model_forward.2} parent=5 // pred_check
      _
    $region38: #{animal_model_forward.2} parent=5 // pred_check_branch
      %235 = sbr.rel (%p232) target = $region40
    $region39: #{animal_model_forward.2} parent=5 // pred_region
      %s236 = ssub.s32 %s11, 1
      %p237 = scmp.lt.s32.totalorder %s21, 2
      %s238 = scalar_select %p237, %s21, 2
      %s239 = scalar_lea.vmem %s0, %s238
      %p240 = pneg %p49
      %p241 = pneg %p46
      %p242 = scmp.lt.s32.totalorder %s20, 1
      %s243 = scalar_select %p242, %s20, 1
      %p244 = scmp.lt.s32.totalorder %s21, 3
      %s245 = scalar_select %p244, %s21, 3
      %s246 = smul.addr %s243, 4
      %s247 = sadd.s32 %s245, %s246
      %s248 = smul.addr %s247, 2
      %s249 = scalar_lea.vmem %s1, %s248
      %p250 = pneg %p77
      %p251 = pneg %p74
      %s252 = sadd.s32 %s21, 1
      %p253 = scmp.lt.s32.totalorder %s20, 1
      %s254 = scalar_select %p253, %s20, 1
      %p255 = scmp.lt.s32.totalorder %s252, 3
      %s256 = scalar_select %p255, %s252, 3
      %s257 = smul.addr %s254, 4
      %s258 = sadd.s32 %s256, %s257
      %s259 = smul.addr %s258, 2
      %s260 = scalar_lea.vmem %s2, %s259
      %p261 = pneg %p107
      %p262 = pneg %p104
      %p263 = pneg %p128
      %p264 = pneg %p125
      %p265 = pneg %p149
      %p266 = pneg %p146
      %p267 = pneg %p175
      %p268 = pneg %p172
      %p269 = scmp.lt.s32.totalorder %s20, 1
      %s270 = scalar_select %p269, %s20, 1
      %s271 = smul.addr %s270, 16
      %s272 = smul.addr %s271, 8
      %s273 = scalar_lea.vmem %s5, %s272
      %p274 = scmp.lt.s32.totalorder %s21, 2
      %s275 = scalar_select %p274, %s21, 2
      %s276 = scalar_lea.vmem %s0, %s275
      %p277 = scmp.lt.s32.totalorder %s20, 1
      %s278 = scalar_select %p277, %s20, 1
      %p279 = scmp.lt.s32.totalorder %s21, 3
      %s280 = scalar_select %p279, %s21, 3
      %s281 = smul.addr %s278, 4
      %s282 = sadd.s32 %s280, %s281
      %s283 = smul.addr %s282, 2
      %s284 = scalar_lea.vmem %s1, %s283
      %s285 = sadd.s32 %s21, 1
      %p286 = scmp.lt.s32.totalorder %s20, 1
      %s287 = scalar_select %p286, %s20, 1
      %p288 = scmp.lt.s32.totalorder %s285, 3
      %s289 = scalar_select %p288, %s285, 3
      %s290 = smul.addr %s287, 4
      %s291 = sadd.s32 %s289, %s290
      %s292 = smul.addr %s291, 2
      %s293 = scalar_lea.vmem %s2, %s292
      %s294 = sadd.s32 %s21, 1
      %p295 = scmp.lt.s32.totalorder %s20, 1
      %s296 = scalar_select %p295, %s20, 1
      %s297 = smul.addr %s296, 16
      %s298 = smul.addr %s297, 8
      %s299 = scalar_lea.vmem %s5, %s298
      %p301 = scmp.eq.s32.totalorder %s21, 0
      // Predicated region
      $region41: #{animal_model_forward.2} parent=39 // pred_check
        %p302 = pneg %p301
      $region42: #{animal_model_forward.2} parent=39 // pred_check_branch
        %304 = sbr.rel (%p302) target = $region44
      $region43: #{animal_model_forward.2} parent=39 // pred_region
        %305 = vst [vmem:[#allocation2] sm:$0xff] 0.0
        %306 = vst [vmem:[#allocation2 + $0x8] sm:$0xff] 0.0
        %307 = vst [vmem:[#allocation2 + $0x10] sm:$0xff] 0.0
        %308 = vst [vmem:[#allocation2 + $0x18] sm:$0xff] 0.0
        %309 = vst [vmem:[#allocation2 + $0x20] sm:$0xff] 0.0
        %310 = vst [vmem:[#allocation2 + $0x28] sm:$0xff] 0.0
        %311 = vst [vmem:[#allocation2 + $0x30] sm:$0xff] 0.0
        %312 = vst [vmem:[#allocation2 + $0x38] sm:$0xff] 0.0
        %313 = vst [vmem:[#allocation2 + $0x40] sm:$0xff] 0.0
        %314 = vst [vmem:[#allocation2 + $0x48] sm:$0xff] 0.0
        %315 = vst [vmem:[#allocation2 + $0x50] sm:$0xff] 0.0
        %316 = vst [vmem:[#allocation2 + $0x58] sm:$0xff] 0.0
        %317 = vst [vmem:[#allocation2 + $0x60] sm:$0xff] 0.0
        %318 = vst [vmem:[#allocation2 + $0x68] sm:$0xff] 0.0
        %319 = vst [vmem:[#allocation2 + $0x70] sm:$0xff] 0.0
        %320 = vst [vmem:[#allocation2 + $0x78] sm:$0xff] 0.0
      $region44: #{animal_model_forward.2} parent=39 // pred_fallthru
        _
      %v321 = vld [vmem:[%s284] sm:$0x3]
      %v322 = vld [vmem:[%s293] sm:$0x3]
      %v323 = vld [vmem:[%s3] sm:$0xf]
      %v324 = vld [vmem:[%s3 + $0x4] sm:$0xf]
      %v325 = vld [vmem:[%s3 + $0x8] sm:$0xf]
      %v326 = vld [vmem:[%s3 + $0xc] sm:$0xf]
      %v327 = vld [vmem:[%s3 + $0x10] sm:$0xf]
      %v328 = vld [vmem:[%s3 + $0x14] sm:$0xf]
      %v329 = vld [vmem:[%s3 + $0x18] sm:$0xf]
      %v330 = vld [vmem:[%s3 + $0x1c] sm:$0xf]
      %v331 = vld [vmem:[%s3 + $0x20] sm:$0xf]
      %v332 = vld [vmem:[%s3 + $0x24] sm:$0xf]
      %v333 = vld [vmem:[%s3 + $0x28] sm:$0xf]
      %v334 = vld [vmem:[%s3 + $0x2c] sm:$0xf]
      %v335 = vld [vmem:[%s3 + $0x30] sm:$0xf]
      %v336 = vld [vmem:[%s3 + $0x34] sm:$0xf]
      %v337 = vld [vmem:[%s3 + $0x38] sm:$0xf]
      %v338 = vld [vmem:[%s3 + $0x3c] sm:$0xf]
      %v355 = vunpack.c.l.b16 %v323
      %v356 = vunpack.c.l.b16 %v324
      %v357 = vunpack.c.l.b16 %v325
      %v358 = vunpack.c.l.b16 %v326
      %v359 = vunpack.c.l.b16 %v327
      %v360 = vunpack.c.l.b16 %v328
      %v361 = vunpack.c.l.b16 %v329
      %v362 = vunpack.c.l.b16 %v330
      %v363 = vunpack.c.l.b16 %v331
      %v364 = vunpack.c.l.b16 %v332
      %v365 = vunpack.c.l.b16 %v333
      %v366 = vunpack.c.l.b16 %v334
      %v367 = vunpack.c.l.b16 %v335
      %v368 = vunpack.c.l.b16 %v336
      %v369 = vunpack.c.l.b16 %v337
      %v370 = vunpack.c.l.b16 %v338
      %v371 = vpack.c.b16 %v356, %v355
      %v372 = vpack.c.b16 %v358, %v357
      %v373 = vpack.c.b16 %v360, %v359
      %v374 = vpack.c.b16 %v362, %v361
      %v375 = vpack.c.b16 %v364, %v363
      %v376 = vpack.c.b16 %v366, %v365
      %v377 = vpack.c.b16 %v368, %v367
      %v378 = vpack.c.b16 %v370, %v369
      %379 = vrot.lane.b32.xlu0 %v371, 125
      %v380 = vpop.permute.xlu0 %379
      %381 = vrot.lane.b32.xlu0 %v372, 125
      %v382 = vpop.permute.xlu0 %381
      %383 = vrot.lane.b32.xlu0 %v373, 125
      %v384 = vpop.permute.xlu0 %383
      %385 = vrot.lane.b32.xlu0 %v374, 125
      %v386 = vpop.permute.xlu0 %385
      %387 = vrot.lane.b32.xlu0 %v375, 125
      %v388 = vpop.permute.xlu0 %387
      %389 = vrot.lane.b32.xlu0 %v376, 125
      %v390 = vpop.permute.xlu0 %389
      %391 = vrot.lane.b32.xlu0 %v377, 125
      %v392 = vpop.permute.xlu0 %391
      %393 = vrot.lane.b32.xlu0 %v378, 125
      %v394 = vpop.permute.xlu0 %393
      %397 = vrot.lane.b32.xlu0 %v321, 127
      %v398 = vpop.permute.xlu0 %397
      %399 = vrot.lane.b32.xlu0 %v322, 127
      %v400 = vpop.permute.xlu0 %399
      %vm401 = vcmask 1039360
      %v402 = vsel %vm401, %v398, %v400
      %vm403 = vcmask 23552
      %v405 = vsel %vm403, %v380, 0
      %v408 = vsel %vm403, %v382, 0
      %v411 = vsel %vm403, %v384, 0
      %v414 = vsel %vm403, %v386, 0
      %v417 = vsel %vm403, %v388, 0
      %v420 = vsel %vm403, %v390, 0
      %v423 = vsel %vm403, %v392, 0
      %v426 = vsel %vm403, %v394, 0
      %vm428 = vcmask 1040384
      %vm429 = vcmask 1041408
      %v430 = vsel %vm428, 4294967295, 65535
      %v431 = vsel %vm429, %v430, 0
      %v433 = vand.u32 %v402, %v431
      %435 = vmatprep.subr.bf16.mxu0 0
      %436 = vmatpush1.bf16.msra.mxu0 %v433
      %437 = vmatprep.subr.bf16.mxu0 0
      %438 = vmatpush1.bf16.msra.mxu0 0
      %439 = vmatprep.subr.bf16.mxu0 0
      %440 = vmatpush1.bf16.msra.mxu0 0
      %441 = vmatprep.subr.bf16.mxu0 0
      %442 = vmatpush1.bf16.msra.mxu0 0
      %443 = vmatprep.subr.bf16.mxu0 0
      %444 = vmatpush1.bf16.msra.mxu0 0
      %445 = vmatprep.subr.bf16.mxu0 0
      %446 = vmatpush1.bf16.msra.mxu0 0
      %447 = vmatprep.subr.bf16.mxu0 0
      %448 = vmatpush1.bf16.msra.mxu0 0
      %449 = vmatprep.subr.bf16.mxu0 0
      %450 = vmatpush1.bf16.msra.mxu0 0
      %451 = vmatprep.subr.bf16.mxu0 0
      %452 = vmatpush1.bf16.msra.mxu0 0
      %453 = vmatprep.subr.bf16.mxu0 0
      %454 = vmatpush1.bf16.msra.mxu0 0
      %455 = vmatprep.subr.bf16.mxu0 0
      %456 = vmatpush1.bf16.msra.mxu0 0
      %457 = vmatprep.subr.bf16.mxu0 0
      %458 = vmatpush1.bf16.msra.mxu0 0
      %459 = vmatprep.subr.bf16.mxu0 0
      %460 = vmatpush1.bf16.msra.mxu0 0
      %461 = vmatprep.subr.bf16.mxu0 0
      %462 = vmatpush1.bf16.msra.mxu0 0
      %463 = vmatprep.subr.bf16.mxu0 0
      %464 = vmatpush1.bf16.msra.mxu0 0
      %465 = vmatprep.subr.bf16.mxu0 0
      %466 = vmatpush1.bf16.msra.mxu0 0
      %467 = vmatprep.mubr.bf16.mxu0 0
      %468 = vmatmul.mubr.bf16.gmra.mrb[0].mxu0 %v405
      %v469 = vpop.f32.mrb[0].mxu0
      %v470 = vadd.f32 0.0, %v469
      %v471 = vpop.f32.mrb[0].mxu0
      %v472 = vpop.f32.mrb[0].mxu0
      %v473 = vadd.f32 0.0, %v472
      %v474 = vpop.f32.mrb[0].mxu0
      %475 = vmatprep.mubr.bf16.mxu0 0
      %476 = vmatmul.mubr.bf16.gmra.mrb[0].mxu0 %v408
      %v477 = vpop.f32.mrb[0].mxu0
      %v478 = vadd.f32 0.0, %v477
      %v479 = vpop.f32.mrb[0].mxu0
      %v480 = vpop.f32.mrb[0].mxu0
      %v481 = vadd.f32 0.0, %v480
      %v482 = vpop.f32.mrb[0].mxu0
      %483 = vmatprep.mubr.bf16.mxu0 0
      %484 = vmatmul.mubr.bf16.gmra.mrb[0].mxu0 %v411
      %v485 = vpop.f32.mrb[0].mxu0
      %v486 = vadd.f32 0.0, %v485
      %v487 = vpop.f32.mrb[0].mxu0
      %v488 = vpop.f32.mrb[0].mxu0
      %v489 = vadd.f32 0.0, %v488
      %v490 = vpop.f32.mrb[0].mxu0
      %491 = vmatprep.mubr.bf16.mxu0 0
      %492 = vmatmul.mubr.bf16.gmra.mrb[0].mxu0 %v414
      %v493 = vpop.f32.mrb[0].mxu0
      %v494 = vadd.f32 0.0, %v493
      %v495 = vpop.f32.mrb[0].mxu0
      %v496 = vpop.f32.mrb[0].mxu0
      %v497 = vadd.f32 0.0, %v496
      %v498 = vpop.f32.mrb[0].mxu0
      %499 = vmatprep.mubr.bf16.mxu0 0
      %500 = vmatmul.mubr.bf16.gmra.mrb[0].mxu0 %v417
      %v501 = vpop.f32.mrb[0].mxu0
      %v502 = vadd.f32 0.0, %v501
      %v503 = vpop.f32.mrb[0].mxu0
      %v504 = vpop.f32.mrb[0].mxu0
      %v505 = vadd.f32 0.0, %v504
      %v506 = vpop.f32.mrb[0].mxu0
      %507 = vmatprep.mubr.bf16.mxu0 0
      %508 = vmatmul.mubr.bf16.gmra.mrb[0].mxu0 %v420
      %v509 = vpop.f32.mrb[0].mxu0
      %v510 = vadd.f32 0.0, %v509
      %v511 = vpop.f32.mrb[0].mxu0
      %v512 = vpop.f32.mrb[0].mxu0
      %v513 = vadd.f32 0.0, %v512
      %v514 = vpop.f32.mrb[0].mxu0
      %515 = vmatprep.mubr.bf16.mxu0 0
      %516 = vmatmul.mubr.bf16.gmra.mrb[0].mxu0 %v423
      %v517 = vpop.f32.mrb[0].mxu0
      %v518 = vadd.f32 0.0, %v517
      %v519 = vpop.f32.mrb[0].mxu0
      %v520 = vpop.f32.mrb[0].mxu0
      %v521 = vadd.f32 0.0, %v520
      %v522 = vpop.f32.mrb[0].mxu0
      %523 = vmatprep.mubr.bf16.mxu0 0
      %524 = vmatmul.mubr.bf16.gmra.mrb[0].mxu0 %v426
      %v525 = vpop.f32.mrb[0].mxu0
      %v526 = vadd.f32 0.0, %v525
      %v527 = vpop.f32.mrb[0].mxu0
      %v528 = vpop.f32.mrb[0].mxu0
      %v529 = vadd.f32 0.0, %v528
      %v530 = vpop.f32.mrb[0].mxu0
      %531 = vdwg.mxu0
      %v533 = vsel %vm403, %v371, 0
      %v536 = vsel %vm403, %v372, 0
      %v539 = vsel %vm403, %v373, 0
      %v542 = vsel %vm403, %v374, 0
      %v545 = vsel %vm403, %v375, 0
      %v548 = vsel %vm403, %v376, 0
      %v551 = vsel %vm403, %v377, 0
      %v554 = vsel %vm403, %v378, 0
      %v557 = vand.u32 %v321, %v431
      %559 = vmatprep.subr.bf16.mxu0 0
      %560 = vmatpush1.bf16.msra.mxu0 %v557
      %561 = vmatprep.subr.bf16.mxu0 0
      %562 = vmatpush1.bf16.msra.mxu0 0
      %563 = vmatprep.subr.bf16.mxu0 0
      %564 = vmatpush1.bf16.msra.mxu0 0
      %565 = vmatprep.subr.bf16.mxu0 0
      %566 = vmatpush1.bf16.msra.mxu0 0
      %567 = vmatprep.subr.bf16.mxu0 0
      %568 = vmatpush1.bf16.msra.mxu0 0
      %569 = vmatprep.subr.bf16.mxu0 0
      %570 = vmatpush1.bf16.msra.mxu0 0
      %571 = vmatprep.subr.bf16.mxu0 0
      %572 = vmatpush1.bf16.msra.mxu0 0
      %573 = vmatprep.subr.bf16.mxu0 0
      %574 = vmatpush1.bf16.msra.mxu0 0
      %575 = vmatprep.subr.bf16.mxu0 0
      %576 = vmatpush1.bf16.msra.mxu0 0
      %577 = vmatprep.subr.bf16.mxu0 0
      %578 = vmatpush1.bf16.msra.mxu0 0
      %579 = vmatprep.subr.bf16.mxu0 0
      %580 = vmatpush1.bf16.msra.mxu0 0
      %581 = vmatprep.subr.bf16.mxu0 0
      %582 = vmatpush1.bf16.msra.mxu0 0
      %583 = vmatprep.subr.bf16.mxu0 0
      %584 = vmatpush1.bf16.msra.mxu0 0
      %585 = vmatprep.subr.bf16.mxu0 0
      %586 = vmatpush1.bf16.msra.mxu0 0
      %587 = vmatprep.subr.bf16.mxu0 0
      %588 = vmatpush1.bf16.msra.mxu0 0
      %589 = vmatprep.subr.bf16.mxu0 0
      %590 = vmatpush1.bf16.msra.mxu0 0
      %591 = vmatprep.mubr.bf16.mxu0 0
      %592 = vmatmul.mubr.bf16.gmra.mrb[0].mxu0 %v533
      %v593 = vpop.f32.mrb[0].mxu0
      %v594 = vadd.f32 %v470, %v593
      %v595 = vpop.f32.mrb[0].mxu0
      %v596 = vpop.f32.mrb[0].mxu0
      %v597 = vadd.f32 %v473, %v596
      %v598 = vpop.f32.mrb[0].mxu0
      %599 = vmatprep.mubr.bf16.mxu0 0
      %600 = vmatmul.mubr.bf16.gmra.mrb[0].mxu0 %v536
      %v601 = vpop.f32.mrb[0].mxu0
      %v602 = vadd.f32 %v478, %v601
      %v603 = vpop.f32.mrb[0].mxu0
      %v604 = vpop.f32.mrb[0].mxu0
      %v605 = vadd.f32 %v481, %v604
      %v606 = vpop.f32.mrb[0].mxu0
      %607 = vmatprep.mubr.bf16.mxu0 0
      %608 = vmatmul.mubr.bf16.gmra.mrb[0].mxu0 %v539
      %v609 = vpop.f32.mrb[0].mxu0
      %v610 = vadd.f32 %v486, %v609
      %v611 = vpop.f32.mrb[0].mxu0
      %v612 = vpop.f32.mrb[0].mxu0
      %v613 = vadd.f32 %v489, %v612
      %v614 = vpop.f32.mrb[0].mxu0
      %615 = vmatprep.mubr.bf16.mxu0 0
      %616 = vmatmul.mubr.bf16.gmra.mrb[0].mxu0 %v542
      %v617 = vpop.f32.mrb[0].mxu0
      %v618 = vadd.f32 %v494, %v617
      %v619 = vpop.f32.mrb[0].mxu0
      %v620 = vpop.f32.mrb[0].mxu0
      %v621 = vadd.f32 %v497, %v620
      %v622 = vpop.f32.mrb[0].mxu0
      %623 = vmatprep.mubr.bf16.mxu0 0
      %624 = vmatmul.mubr.bf16.gmra.mrb[0].mxu0 %v545
      %v625 = vpop.f32.mrb[0].mxu0
      %v626 = vadd.f32 %v502, %v625
      %v627 = vpop.f32.mrb[0].mxu0
      %v628 = vpop.f32.mrb[0].mxu0
      %v629 = vadd.f32 %v505, %v628
      %v630 = vpop.f32.mrb[0].mxu0
      %631 = vmatprep.mubr.bf16.mxu0 0
      %632 = vmatmul.mubr.bf16.gmra.mrb[0].mxu0 %v548
      %v633 = vpop.f32.mrb[0].mxu0
      %v634 = vadd.f32 %v510, %v633
      %v635 = vpop.f32.mrb[0].mxu0
      %v636 = vpop.f32.mrb[0].mxu0
      %v637 = vadd.f32 %v513, %v636
      %v638 = vpop.f32.mrb[0].mxu0
      %639 = vmatprep.mubr.bf16.mxu0 0
      %640 = vmatmul.mubr.bf16.gmra.mrb[0].mxu0 %v551
      %v641 = vpop.f32.mrb[0].mxu0
      %v642 = vadd.f32 %v518, %v641
      %v643 = vpop.f32.mrb[0].mxu0
      %v644 = vpop.f32.mrb[0].mxu0
      %v645 = vadd.f32 %v521, %v644
      %v646 = vpop.f32.mrb[0].mxu0
      %647 = vmatprep.mubr.bf16.mxu0 0
      %648 = vmatmul.mubr.bf16.gmra.mrb[0].mxu0 %v554
      %v649 = vpop.f32.mrb[0].mxu0
      %v650 = vadd.f32 %v526, %v649
      %v651 = vpop.f32.mrb[0].mxu0
      %v652 = vpop.f32.mrb[0].mxu0
      %v653 = vadd.f32 %v529, %v652
      %v654 = vpop.f32.mrb[0].mxu0
      %655 = vdwg.mxu0
      %656 = vrot.lane.b32.xlu0 %v371, 122
      %v657 = vpop.permute.xlu0 %656
      %658 = vrot.lane.b32.xlu0 %v372, 122
      %v659 = vpop.permute.xlu0 %658
      %660 = vrot.lane.b32.xlu0 %v373, 122
      %v661 = vpop.permute.xlu0 %660
      %662 = vrot.lane.b32.xlu0 %v374, 122
      %v663 = vpop.permute.xlu0 %662
      %664 = vrot.lane.b32.xlu0 %v375, 122
      %v665 = vpop.permute.xlu0 %664
      %666 = vrot.lane.b32.xlu0 %v376, 122
      %v667 = vpop.permute.xlu0 %666
      %668 = vrot.lane.b32.xlu0 %v377, 122
      %v669 = vpop.permute.xlu0 %668
      %670 = vrot.lane.b32.xlu0 %v378, 122
      %v671 = vpop.permute.xlu0 %670
      %672 = vrot.lane.b32.xlu0 %v321, 126
      %v673 = vpop.permute.xlu0 %672
      %674 = vrot.lane.b32.xlu0 %v322, 126
      %v675 = vpop.permute.xlu0 %674
      %vm676 = vcmask 1031168
      %v677 = vsel %vm676, %v673, %v675
      %v679 = vsel %vm403, %v657, 0
      %v682 = vsel %vm403, %v659, 0
      %v685 = vsel %vm403, %v661, 0
      %v688 = vsel %vm403, %v663, 0
      %v691 = vsel %vm403, %v665, 0
      %v694 = vsel %vm403, %v667, 0
      %v697 = vsel %vm403, %v669, 0
      %v700 = vsel %vm403, %v671, 0
      %v703 = vand.u32 %v677, %v431
      %705 = vmatprep.subr.bf16.mxu0 0
      %706 = vmatpush1.bf16.msra.mxu0 %v703
      %707 = vmatprep.subr.bf16.mxu0 0
      %708 = vmatpush1.bf16.msra.mxu0 0
      %709 = vmatprep.subr.bf16.mxu0 0
      %710 = vmatpush1.bf16.msra.mxu0 0
      %711 = vmatprep.subr.bf16.mxu0 0
      %712 = vmatpush1.bf16.msra.mxu0 0
      %713 = vmatprep.subr.bf16.mxu0 0
      %714 = vmatpush1.bf16.msra.mxu0 0
      %715 = vmatprep.subr.bf16.mxu0 0
      %716 = vmatpush1.bf16.msra.mxu0 0
      %717 = vmatprep.subr.bf16.mxu0 0
      %718 = vmatpush1.bf16.msra.mxu0 0
      %719 = vmatprep.subr.bf16.mxu0 0
      %720 = vmatpush1.bf16.msra.mxu0 0
      %721 = vmatprep.subr.bf16.mxu0 0
      %722 = vmatpush1.bf16.msra.mxu0 0
      %723 = vmatprep.subr.bf16.mxu0 0
      %724 = vmatpush1.bf16.msra.mxu0 0
      %725 = vmatprep.subr.bf16.mxu0 0
      %726 = vmatpush1.bf16.msra.mxu0 0
      %727 = vmatprep.subr.bf16.mxu0 0
      %728 = vmatpush1.bf16.msra.mxu0 0
      %729 = vmatprep.subr.bf16.mxu0 0
      %730 = vmatpush1.bf16.msra.mxu0 0
      %731 = vmatprep.subr.bf16.mxu0 0
      %732 = vmatpush1.bf16.msra.mxu0 0
      %733 = vmatprep.subr.bf16.mxu0 0
      %734 = vmatpush1.bf16.msra.mxu0 0
      %735 = vmatprep.subr.bf16.mxu0 0
      %736 = vmatpush1.bf16.msra.mxu0 0
      %737 = vmatprep.mubr.bf16.mxu0 0
      %738 = vmatmul.mubr.bf16.gmra.mrb[0].mxu0 %v679
      %v739 = vpop.f32.mrb[0].mxu0
      %v740 = vadd.f32 0.0, %v739
      %v741 = vpop.f32.mrb[0].mxu0
      %v742 = vpop.f32.mrb[0].mxu0
      %v743 = vadd.f32 0.0, %v742
      %v744 = vpop.f32.mrb[0].mxu0
      %745 = vmatprep.mubr.bf16.mxu0 0
      %746 = vmatmul.mubr.bf16.gmra.mrb[0].mxu0 %v682
      %v747 = vpop.f32.mrb[0].mxu0
      %v748 = vadd.f32 0.0, %v747
      %v749 = vpop.f32.mrb[0].mxu0
      %v750 = vpop.f32.mrb[0].mxu0
      %v751 = vadd.f32 0.0, %v750
      %v752 = vpop.f32.mrb[0].mxu0
      %753 = vmatprep.mubr.bf16.mxu0 0
      %754 = vmatmul.mubr.bf16.gmra.mrb[0].mxu0 %v685
      %v755 = vpop.f32.mrb[0].mxu0
      %v756 = vadd.f32 0.0, %v755
      %v757 = vpop.f32.mrb[0].mxu0
      %v758 = vpop.f32.mrb[0].mxu0
      %v759 = vadd.f32 0.0, %v758
      %v760 = vpop.f32.mrb[0].mxu0
      %761 = vmatprep.mubr.bf16.mxu0 0
      %762 = vmatmul.mubr.bf16.gmra.mrb[0].mxu0 %v688
      %v763 = vpop.f32.mrb[0].mxu0
      %v764 = vadd.f32 0.0, %v763
      %v765 = vpop.f32.mrb[0].mxu0
      %v766 = vpop.f32.mrb[0].mxu0
      %v767 = vadd.f32 0.0, %v766
      %v768 = vpop.f32.mrb[0].mxu0
      %769 = vmatprep.mubr.bf16.mxu0 0
      %770 = vmatmul.mubr.bf16.gmra.mrb[0].mxu0 %v691
      %v771 = vpop.f32.mrb[0].mxu0
      %v772 = vadd.f32 0.0, %v771
      %v773 = vpop.f32.mrb[0].mxu0
      %v774 = vpop.f32.mrb[0].mxu0
      %v775 = vadd.f32 0.0, %v774
      %v776 = vpop.f32.mrb[0].mxu0
      %777 = vmatprep.mubr.bf16.mxu0 0
      %778 = vmatmul.mubr.bf16.gmra.mrb[0].mxu0 %v694
      %v779 = vpop.f32.mrb[0].mxu0
      %v780 = vadd.f32 0.0, %v779
      %v781 = vpop.f32.mrb[0].mxu0
      %v782 = vpop.f32.mrb[0].mxu0
      %v783 = vadd.f32 0.0, %v782
      %v784 = vpop.f32.mrb[0].mxu0
      %785 = vmatprep.mubr.bf16.mxu0 0
      %786 = vmatmul.mubr.bf16.gmra.mrb[0].mxu0 %v697
      %v787 = vpop.f32.mrb[0].mxu0
      %v788 = vadd.f32 0.0, %v787
      %v789 = vpop.f32.mrb[0].mxu0
      %v790 = vpop.f32.mrb[0].mxu0
      %v791 = vadd.f32 0.0, %v790
      %v792 = vpop.f32.mrb[0].mxu0
      %793 = vmatprep.mubr.bf16.mxu0 0
      %794 = vmatmul.mubr.bf16.gmra.mrb[0].mxu0 %v700
      %v795 = vpop.f32.mrb[0].mxu0
      %v796 = vadd.f32 0.0, %v795
      %v797 = vpop.f32.mrb[0].mxu0
      %v798 = vpop.f32.mrb[0].mxu0
      %v799 = vadd.f32 0.0, %v798
      %v800 = vpop.f32.mrb[0].mxu0
      %801 = vdwg.mxu0
      %v802 = vadd.f32 %v594, %v740
      %v803 = vadd.f32 %v597, %v743
      %v804 = vadd.f32 %v602, %v748
      %v805 = vadd.f32 %v605, %v751
      %v806 = vadd.f32 %v610, %v756
      %v807 = vadd.f32 %v613, %v759
      %v808 = vadd.f32 %v618, %v764
      %v809 = vadd.f32 %v621, %v767
      %v810 = vadd.f32 %v626, %v772
      %v811 = vadd.f32 %v629, %v775
      %v812 = vadd.f32 %v634, %v780
      %v813 = vadd.f32 %v637, %v783
      %v814 = vadd.f32 %v642, %v788
      %v815 = vadd.f32 %v645, %v791
      %v816 = vadd.f32 %v650, %v796
      %v817 = vadd.f32 %v653, %v799
      %818 = vrot.lane.b32.xlu0 %v371, 119
      %v819 = vpop.permute.xlu0 %818
      %820 = vrot.lane.b32.xlu0 %v372, 119
      %v821 = vpop.permute.xlu0 %820
      %822 = vrot.lane.b32.xlu0 %v373, 119
      %v823 = vpop.permute.xlu0 %822
      %824 = vrot.lane.b32.xlu0 %v374, 119
      %v825 = vpop.permute.xlu0 %824
      %826 = vrot.lane.b32.xlu0 %v375, 119
      %v827 = vpop.permute.xlu0 %826
      %828 = vrot.lane.b32.xlu0 %v376, 119
      %v829 = vpop.permute.xlu0 %828
      %830 = vrot.lane.b32.xlu0 %v377, 119
      %v831 = vpop.permute.xlu0 %830
      %832 = vrot.lane.b32.xlu0 %v378, 119
      %v833 = vpop.permute.xlu0 %832
      %834 = vrot.lane.b32.xlu0 %v321, 110
      %v835 = vpop.permute.xlu0 %834
      %836 = vrot.lane.b32.xlu0 %v322, 110
      %v837 = vpop.permute.xlu0 %836
      %vm838 = vcmask 900096
      %v839 = vsel %vm838, %v835, %v837
      %v841 = vsel %vm403, %v819, 0
      %v844 = vsel %vm403, %v821, 0
      %v847 = vsel %vm403, %v823, 0
      %v850 = vsel %vm403, %v825, 0
      %v853 = vsel %vm403, %v827, 0
      %v856 = vsel %vm403, %v829, 0
      %v859 = vsel %vm403, %v831, 0
      %v862 = vsel %vm403, %v833, 0
      %v865 = vand.u32 %v839, %v431
      %867 = vmatprep.subr.bf16.mxu0 0
      %868 = vmatpush1.bf16.msra.mxu0 %v865
      %869 = vmatprep.subr.bf16.mxu0 0
      %870 = vmatpush1.bf16.msra.mxu0 0
      %871 = vmatprep.subr.bf16.mxu0 0
      %872 = vmatpush1.bf16.msra.mxu0 0
      %873 = vmatprep.subr.bf16.mxu0 0
      %874 = vmatpush1.bf16.msra.mxu0 0
      %875 = vmatprep.subr.bf16.mxu0 0
      %876 = vmatpush1.bf16.msra.mxu0 0
      %877 = vmatprep.subr.bf16.mxu0 0
      %878 = vmatpush1.bf16.msra.mxu0 0
      %879 = vmatprep.subr.bf16.mxu0 0
      %880 = vmatpush1.bf16.msra.mxu0 0
      %881 = vmatprep.subr.bf16.mxu0 0
      %882 = vmatpush1.bf16.msra.mxu0 0
      %883 = vmatprep.subr.bf16.mxu0 0
      %884 = vmatpush1.bf16.msra.mxu0 0
      %885 = vmatprep.subr.bf16.mxu0 0
      %886 = vmatpush1.bf16.msra.mxu0 0
      %887 = vmatprep.subr.bf16.mxu0 0
      %888 = vmatpush1.bf16.msra.mxu0 0
      %889 = vmatprep.subr.bf16.mxu0 0
      %890 = vmatpush1.bf16.msra.mxu0 0
      %891 = vmatprep.subr.bf16.mxu0 0
      %892 = vmatpush1.bf16.msra.mxu0 0
      %893 = vmatprep.subr.bf16.mxu0 0
      %894 = vmatpush1.bf16.msra.mxu0 0
      %895 = vmatprep.subr.bf16.mxu0 0
      %896 = vmatpush1.bf16.msra.mxu0 0
      %897 = vmatprep.subr.bf16.mxu0 0
      %898 = vmatpush1.bf16.msra.mxu0 0
      %899 = vmatprep.mubr.bf16.mxu0 0
      %900 = vmatmul.mubr.bf16.gmra.mrb[0].mxu0 %v841
      %v901 = vpop.f32.mrb[0].mxu0
      %v902 = vadd.f32 0.0, %v901
      %v903 = vpop.f32.mrb[0].mxu0
      %v904 = vpop.f32.mrb[0].mxu0
      %v905 = vadd.f32 0.0, %v904
      %v906 = vpop.f32.mrb[0].mxu0
      %907 = vmatprep.mubr.bf16.mxu0 0
      %908 = vmatmul.mubr.bf16.gmra.mrb[0].mxu0 %v844
      %v909 = vpop.f32.mrb[0].mxu0
      %v910 = vadd.f32 0.0, %v909
      %v911 = vpop.f32.mrb[0].mxu0
      %v912 = vpop.f32.mrb[0].mxu0
      %v913 = vadd.f32 0.0, %v912
      %v914 = vpop.f32.mrb[0].mxu0
      %915 = vmatprep.mubr.bf16.mxu0 0
      %916 = vmatmul.mubr.bf16.gmra.mrb[0].mxu0 %v847
      %v917 = vpop.f32.mrb[0].mxu0
      %v918 = vadd.f32 0.0, %v917
      %v919 = vpop.f32.mrb[0].mxu0
      %v920 = vpop.f32.mrb[0].mxu0
      %v921 = vadd.f32 0.0, %v920
      %v922 = vpop.f32.mrb[0].mxu0
      %923 = vmatprep.mubr.bf16.mxu0 0
      %924 = vmatmul.mubr.bf16.gmra.mrb[0].mxu0 %v850
      %v925 = vpop.f32.mrb[0].mxu0
      %v926 = vadd.f32 0.0, %v925
      %v927 = vpop.f32.mrb[0].mxu0
      %v928 = vpop.f32.mrb[0].mxu0
      %v929 = vadd.f32 0.0, %v928
      %v930 = vpop.f32.mrb[0].mxu0
      %931 = vmatprep.mubr.bf16.mxu0 0
      %932 = vmatmul.mubr.bf16.gmra.mrb[0].mxu0 %v853
      %v933 = vpop.f32.mrb[0].mxu0
      %v934 = vadd.f32 0.0, %v933
      %v935 = vpop.f32.mrb[0].mxu0
      %v936 = vpop.f32.mrb[0].mxu0
      %v937 = vadd.f32 0.0, %v936
      %v938 = vpop.f32.mrb[0].mxu0
      %939 = vmatprep.mubr.bf16.mxu0 0
      %940 = vmatmul.mubr.bf16.gmra.mrb[0].mxu0 %v856
      %v941 = vpop.f32.mrb[0].mxu0
      %v942 = vadd.f32 0.0, %v941
      %v943 = vpop.f32.mrb[0].mxu0
      %v944 = vpop.f32.mrb[0].mxu0
      %v945 = vadd.f32 0.0, %v944
      %v946 = vpop.f32.mrb[0].mxu0
      %947 = vmatprep.mubr.bf16.mxu0 0
      %948 = vmatmul.mubr.bf16.gmra.mrb[0].mxu0 %v859
      %v949 = vpop.f32.mrb[0].mxu0
      %v950 = vadd.f32 0.0, %v949
      %v951 = vpop.f32.mrb[0].mxu0
      %v952 = vpop.f32.mrb[0].mxu0
      %v953 = vadd.f32 0.0, %v952
      %v954 = vpop.f32.mrb[0].mxu0
      %955 = vmatprep.mubr.bf16.mxu0 0
      %956 = vmatmul.mubr.bf16.gmra.mrb[0].mxu0 %v862
      %v957 = vpop.f32.mrb[0].mxu0
      %v958 = vadd.f32 0.0, %v957
      %v959 = vpop.f32.mrb[0].mxu0
      %v960 = vpop.f32.mrb[0].mxu0
      %v961 = vadd.f32 0.0, %v960
      %v962 = vpop.f32.mrb[0].mxu0
      %963 = vdwg.mxu0
      %v964 = vadd.f32 %v802, %v902
      %v965 = vadd.f32 %v803, %v905
      %v966 = vadd.f32 %v804, %v910
      %v967 = vadd.f32 %v805, %v913
      %v968 = vadd.f32 %v806, %v918
      %v969 = vadd.f32 %v807, %v921
      %v970 = vadd.f32 %v808, %v926
      %v971 = vadd.f32 %v809, %v929
      %v972 = vadd.f32 %v810, %v934
      %v973 = vadd.f32 %v811, %v937
      %v974 = vadd.f32 %v812, %v942
      %v975 = vadd.f32 %v813, %v945
      %v976 = vadd.f32 %v814, %v950
      %v977 = vadd.f32 %v815, %v953
      %v978 = vadd.f32 %v816, %v958
      %v979 = vadd.f32 %v817, %v961
      %980 = vrot.lane.b32.xlu0 %v371, 116
      %v981 = vpop.permute.xlu0 %980
      %982 = vrot.lane.b32.xlu0 %v372, 116
      %v983 = vpop.permute.xlu0 %982
      %984 = vrot.lane.b32.xlu0 %v373, 116
      %v985 = vpop.permute.xlu0 %984
      %986 = vrot.lane.b32.xlu0 %v374, 116
      %v987 = vpop.permute.xlu0 %986
      %988 = vrot.lane.b32.xlu0 %v375, 116
      %v989 = vpop.permute.xlu0 %988
      %990 = vrot.lane.b32.xlu0 %v376, 116
      %v991 = vpop.permute.xlu0 %990
      %992 = vrot.lane.b32.xlu0 %v377, 116
      %v993 = vpop.permute.xlu0 %992
      %994 = vrot.lane.b32.xlu0 %v378, 116
      %v995 = vpop.permute.xlu0 %994
      %996 = vrot.lane.b32.xlu0 %v321, 109
      %v997 = vpop.permute.xlu0 %996
      %998 = vrot.lane.b32.xlu0 %v322, 109
      %v999 = vpop.permute.xlu0 %998
      %vm1000 = vcmask 891904
      %v1001 = vsel %vm1000, %v997, %v999
      %v1003 = vsel %vm403, %v981, 0
      %v1006 = vsel %vm403, %v983, 0
      %v1009 = vsel %vm403, %v985, 0
      %v1012 = vsel %vm403, %v987, 0
      %v1015 = vsel %vm403, %v989, 0
      %v1018 = vsel %vm403, %v991, 0
      %v1021 = vsel %vm403, %v993, 0
      %v1024 = vsel %vm403, %v995, 0
      %v1027 = vand.u32 %v1001, %v431
      %1029 = vmatprep.subr.bf16.mxu0 0
      %1030 = vmatpush1.bf16.msra.mxu0 %v1027
      %1031 = vmatprep.subr.bf16.mxu0 0
      %1032 = vmatpush1.bf16.msra.mxu0 0
      %1033 = vmatprep.subr.bf16.mxu0 0
      %1034 = vmatpush1.bf16.msra.mxu0 0
      %1035 = vmatprep.subr.bf16.mxu0 0
      %1036 = vmatpush1.bf16.msra.mxu0 0
      %1037 = vmatprep.subr.bf16.mxu0 0
      %1038 = vmatpush1.bf16.msra.mxu0 0
      %1039 = vmatprep.subr.bf16.mxu0 0
      %1040 = vmatpush1.bf16.msra.mxu0 0
      %1041 = vmatprep.subr.bf16.mxu0 0
      %1042 = vmatpush1.bf16.msra.mxu0 0
      %1043 = vmatprep.subr.bf16.mxu0 0
      %1044 = vmatpush1.bf16.msra.mxu0 0
      %1045 = vmatprep.subr.bf16.mxu0 0
      %1046 = vmatpush1.bf16.msra.mxu0 0
      %1047 = vmatprep.subr.bf16.mxu0 0
      %1048 = vmatpush1.bf16.msra.mxu0 0
      %1049 = vmatprep.subr.bf16.mxu0 0
      %1050 = vmatpush1.bf16.msra.mxu0 0
      %1051 = vmatprep.subr.bf16.mxu0 0
      %1052 = vmatpush1.bf16.msra.mxu0 0
      %1053 = vmatprep.subr.bf16.mxu0 0
      %1054 = vmatpush1.bf16.msra.mxu0 0
      %1055 = vmatprep.subr.bf16.mxu0 0
      %1056 = vmatpush1.bf16.msra.mxu0 0
      %1057 = vmatprep.subr.bf16.mxu0 0
      %1058 = vmatpush1.bf16.msra.mxu0 0
      %1059 = vmatprep.subr.bf16.mxu0 0
      %1060 = vmatpush1.bf16.msra.mxu0 0
      %1061 = vmatprep.mubr.bf16.mxu0 0
      %1062 = vmatmul.mubr.bf16.gmra.mrb[0].mxu0 %v1003
      %v1063 = vpop.f32.mrb[0].mxu0
      %v1064 = vadd.f32 0.0, %v1063
      %v1065 = vpop.f32.mrb[0].mxu0
      %v1066 = vpop.f32.mrb[0].mxu0
      %v1067 = vadd.f32 0.0, %v1066
      %v1068 = vpop.f32.mrb[0].mxu0
      %1069 = vmatprep.mubr.bf16.mxu0 0
      %1070 = vmatmul.mubr.bf16.gmra.mrb[0].mxu0 %v1006
      %v1071 = vpop.f32.mrb[0].mxu0
      %v1072 = vadd.f32 0.0, %v1071
      %v1073 = vpop.f32.mrb[0].mxu0
      %v1074 = vpop.f32.mrb[0].mxu0
      %v1075 = vadd.f32 0.0, %v1074
      %v1076 = vpop.f32.mrb[0].mxu0
      %1077 = vmatprep.mubr.bf16.mxu0 0
      %1078 = vmatmul.mubr.bf16.gmra.mrb[0].mxu0 %v1009
      %v1079 = vpop.f32.mrb[0].mxu0
      %v1080 = vadd.f32 0.0, %v1079
      %v1081 = vpop.f32.mrb[0].mxu0
      %v1082 = vpop.f32.mrb[0].mxu0
      %v1083 = vadd.f32 0.0, %v1082
      %v1084 = vpop.f32.mrb[0].mxu0
      %1085 = vmatprep.mubr.bf16.mxu0 0
      %1086 = vmatmul.mubr.bf16.gmra.mrb[0].mxu0 %v1012
      %v1087 = vpop.f32.mrb[0].mxu0
      %v1088 = vadd.f32 0.0, %v1087
      %v1089 = vpop.f32.mrb[0].mxu0
      %v1090 = vpop.f32.mrb[0].mxu0
      %v1091 = vadd.f32 0.0, %v1090
      %v1092 = vpop.f32.mrb[0].mxu0
      %1093 = vmatprep.mubr.bf16.mxu0 0
      %1094 = vmatmul.mubr.bf16.gmra.mrb[0].mxu0 %v1015
      %v1095 = vpop.f32.mrb[0].mxu0
      %v1096 = vadd.f32 0.0, %v1095
      %v1097 = vpop.f32.mrb[0].mxu0
      %v1098 = vpop.f32.mrb[0].mxu0
      %v1099 = vadd.f32 0.0, %v1098
      %v1100 = vpop.f32.mrb[0].mxu0
      %1101 = vmatprep.mubr.bf16.mxu0 0
      %1102 = vmatmul.mubr.bf16.gmra.mrb[0].mxu0 %v1018
      %v1103 = vpop.f32.mrb[0].mxu0
      %v1104 = vadd.f32 0.0, %v1103
      %v1105 = vpop.f32.mrb[0].mxu0
      %v1106 = vpop.f32.mrb[0].mxu0
      %v1107 = vadd.f32 0.0, %v1106
      %v1108 = vpop.f32.mrb[0].mxu0
      %1109 = vmatprep.mubr.bf16.mxu0 0
      %1110 = vmatmul.mubr.bf16.gmra.mrb[0].mxu0 %v1021
      %v1111 = vpop.f32.mrb[0].mxu0
      %v1112 = vadd.f32 0.0, %v1111
      %v1113 = vpop.f32.mrb[0].mxu0
      %v1114 = vpop.f32.mrb[0].mxu0
      %v1115 = vadd.f32 0.0, %v1114
      %v1116 = vpop.f32.mrb[0].mxu0
      %1117 = vmatprep.mubr.bf16.mxu0 0
      %1118 = vmatmul.mubr.bf16.gmra.mrb[0].mxu0 %v1024
      %v1119 = vpop.f32.mrb[0].mxu0
      %v1120 = vadd.f32 0.0, %v1119
      %v1121 = vpop.f32.mrb[0].mxu0
      %v1122 = vpop.f32.mrb[0].mxu0
      %v1123 = vadd.f32 0.0, %v1122
      %v1124 = vpop.f32.mrb[0].mxu0
      %1125 = vdwg.mxu0
      %v1126 = vadd.f32 %v964, %v1064
      %v1127 = vadd.f32 %v965, %v1067
      %v1128 = vadd.f32 %v966, %v1072
      %v1129 = vadd.f32 %v967, %v1075
      %v1130 = vadd.f32 %v968, %v1080
      %v1131 = vadd.f32 %v969, %v1083
      %v1132 = vadd.f32 %v970, %v1088
      %v1133 = vadd.f32 %v971, %v1091
      %v1134 = vadd.f32 %v972, %v1096
      %v1135 = vadd.f32 %v973, %v1099
      %v1136 = vadd.f32 %v974, %v1104
      %v1137 = vadd.f32 %v975, %v1107
      %v1138 = vadd.f32 %v976, %v1112
      %v1139 = vadd.f32 %v977, %v1115
      %v1140 = vadd.f32 %v978, %v1120
      %v1141 = vadd.f32 %v979, %v1123
      %1142 = vrot.lane.b32.xlu0 %v371, 113
      %v1143 = vpop.permute.xlu0 %1142
      %1144 = vrot.lane.b32.xlu0 %v372, 113
      %v1145 = vpop.permute.xlu0 %1144
      %1146 = vrot.lane.b32.xlu0 %v373, 113
      %v1147 = vpop.permute.xlu0 %1146
      %1148 = vrot.lane.b32.xlu0 %v374, 113
      %v1149 = vpop.permute.xlu0 %1148
      %1150 = vrot.lane.b32.xlu0 %v375, 113
      %v1151 = vpop.permute.xlu0 %1150
      %1152 = vrot.lane.b32.xlu0 %v376, 113
      %v1153 = vpop.permute.xlu0 %1152
      %1154 = vrot.lane.b32.xlu0 %v377, 113
      %v1155 = vpop.permute.xlu0 %1154
      %1156 = vrot.lane.b32.xlu0 %v378, 113
      %v1157 = vpop.permute.xlu0 %1156
      %1158 = vrot.lane.b32.xlu0 %v321, 108
      %v1159 = vpop.permute.xlu0 %1158
      %1160 = vrot.lane.b32.xlu0 %v322, 108
      %v1161 = vpop.permute.xlu0 %1160
      %vm1162 = vcmask 883712
      %v1163 = vsel %vm1162, %v1159, %v1161
      %v1165 = vsel %vm403, %v1143, 0
      %v1168 = vsel %vm403, %v1145, 0
      %v1171 = vsel %vm403, %v1147, 0
      %v1174 = vsel %vm403, %v1149, 0
      %v1177 = vsel %vm403, %v1151, 0
      %v1180 = vsel %vm403, %v1153, 0
      %v1183 = vsel %vm403, %v1155, 0
      %v1186 = vsel %vm403, %v1157, 0
      %v1189 = vand.u32 %v1163, %v431
      %1191 = vmatprep.subr.bf16.mxu0 0
      %1192 = vmatpush1.bf16.msra.mxu0 %v1189
      %1193 = vmatprep.subr.bf16.mxu0 0
      %1194 = vmatpush1.bf16.msra.mxu0 0
      %1195 = vmatprep.subr.bf16.mxu0 0
      %1196 = vmatpush1.bf16.msra.mxu0 0
      %1197 = vmatprep.subr.bf16.mxu0 0
      %1198 = vmatpush1.bf16.msra.mxu0 0
      %1199 = vmatprep.subr.bf16.mxu0 0
      %1200 = vmatpush1.bf16.msra.mxu0 0
      %1201 = vmatprep.subr.bf16.mxu0 0
      %1202 = vmatpush1.bf16.msra.mxu0 0
      %1203 = vmatprep.subr.bf16.mxu0 0
      %1204 = vmatpush1.bf16.msra.mxu0 0
      %1205 = vmatprep.subr.bf16.mxu0 0
      %1206 = vmatpush1.bf16.msra.mxu0 0
      %1207 = vmatprep.subr.bf16.mxu0 0
      %1208 = vmatpush1.bf16.msra.mxu0 0
      %1209 = vmatprep.subr.bf16.mxu0 0
      %1210 = vmatpush1.bf16.msra.mxu0 0
      %1211 = vmatprep.subr.bf16.mxu0 0
      %1212 = vmatpush1.bf16.msra.mxu0 0
      %1213 = vmatprep.subr.bf16.mxu0 0
      %1214 = vmatpush1.bf16.msra.mxu0 0
      %1215 = vmatprep.subr.bf16.mxu0 0
      %1216 = vmatpush1.bf16.msra.mxu0 0
      %1217 = vmatprep.subr.bf16.mxu0 0
      %1218 = vmatpush1.bf16.msra.mxu0 0
      %1219 = vmatprep.subr.bf16.mxu0 0
      %1220 = vmatpush1.bf16.msra.mxu0 0
      %1221 = vmatprep.subr.bf16.mxu0 0
      %1222 = vmatpush1.bf16.msra.mxu0 0
      %1223 = vmatprep.mubr.bf16.mxu0 0
      %1224 = vmatmul.mubr.bf16.gmra.mrb[0].mxu0 %v1165
      %v1225 = vpop.f32.mrb[0].mxu0
      %v1226 = vadd.f32 0.0, %v1225
      %v1227 = vpop.f32.mrb[0].mxu0
      %v1228 = vpop.f32.mrb[0].mxu0
      %v1229 = vadd.f32 0.0, %v1228
      %v1230 = vpop.f32.mrb[0].mxu0
      %1231 = vmatprep.mubr.bf16.mxu0 0
      %1232 = vmatmul.mubr.bf16.gmra.mrb[0].mxu0 %v1168
      %v1233 = vpop.f32.mrb[0].mxu0
      %v1234 = vadd.f32 0.0, %v1233
      %v1235 = vpop.f32.mrb[0].mxu0
      %v1236 = vpop.f32.mrb[0].mxu0
      %v1237 = vadd.f32 0.0, %v1236
      %v1238 = vpop.f32.mrb[0].mxu0
      %1239 = vmatprep.mubr.bf16.mxu0 0
      %1240 = vmatmul.mubr.bf16.gmra.mrb[0].mxu0 %v1171
      %v1241 = vpop.f32.mrb[0].mxu0
      %v1242 = vadd.f32 0.0, %v1241
      %v1243 = vpop.f32.mrb[0].mxu0
      %v1244 = vpop.f32.mrb[0].mxu0
      %v1245 = vadd.f32 0.0, %v1244
      %v1246 = vpop.f32.mrb[0].mxu0
      %1247 = vmatprep.mubr.bf16.mxu0 0
      %1248 = vmatmul.mubr.bf16.gmra.mrb[0].mxu0 %v1174
      %v1249 = vpop.f32.mrb[0].mxu0
      %v1250 = vadd.f32 0.0, %v1249
      %v1251 = vpop.f32.mrb[0].mxu0
      %v1252 = vpop.f32.mrb[0].mxu0
      %v1253 = vadd.f32 0.0, %v1252
      %v1254 = vpop.f32.mrb[0].mxu0
      %1255 = vmatprep.mubr.bf16.mxu0 0
      %1256 = vmatmul.mubr.bf16.gmra.mrb[0].mxu0 %v1177
      %v1257 = vpop.f32.mrb[0].mxu0
      %v1258 = vadd.f32 0.0, %v1257
      %v1259 = vpop.f32.mrb[0].mxu0
      %v1260 = vpop.f32.mrb[0].mxu0
      %v1261 = vadd.f32 0.0, %v1260
      %v1262 = vpop.f32.mrb[0].mxu0
      %1263 = vmatprep.mubr.bf16.mxu0 0
      %1264 = vmatmul.mubr.bf16.gmra.mrb[0].mxu0 %v1180
      %v1265 = vpop.f32.mrb[0].mxu0
      %v1266 = vadd.f32 0.0, %v1265
      %v1267 = vpop.f32.mrb[0].mxu0
      %v1268 = vpop.f32.mrb[0].mxu0
      %v1269 = vadd.f32 0.0, %v1268
      %v1270 = vpop.f32.mrb[0].mxu0
      %1271 = vmatprep.mubr.bf16.mxu0 0
      %1272 = vmatmul.mubr.bf16.gmra.mrb[0].mxu0 %v1183
      %v1273 = vpop.f32.mrb[0].mxu0
      %v1274 = vadd.f32 0.0, %v1273
      %v1275 = vpop.f32.mrb[0].mxu0
      %v1276 = vpop.f32.mrb[0].mxu0
      %v1277 = vadd.f32 0.0, %v1276
      %v1278 = vpop.f32.mrb[0].mxu0
      %1279 = vmatprep.mubr.bf16.mxu0 0
      %1280 = vmatmul.mubr.bf16.gmra.mrb[0].mxu0 %v1186
      %v1281 = vpop.f32.mrb[0].mxu0
      %v1282 = vadd.f32 0.0, %v1281
      %v1283 = vpop.f32.mrb[0].mxu0
      %v1284 = vpop.f32.mrb[0].mxu0
      %v1285 = vadd.f32 0.0, %v1284
      %v1286 = vpop.f32.mrb[0].mxu0
      %1287 = vdwg.mxu0
      %v1288 = vadd.f32 %v1126, %v1226
      %v1289 = vadd.f32 %v1127, %v1229
      %v1290 = vadd.f32 %v1128, %v1234
      %v1291 = vadd.f32 %v1129, %v1237
      %v1292 = vadd.f32 %v1130, %v1242
      %v1293 = vadd.f32 %v1131, %v1245
      %v1294 = vadd.f32 %v1132, %v1250
      %v1295 = vadd.f32 %v1133, %v1253
      %v1296 = vadd.f32 %v1134, %v1258
      %v1297 = vadd.f32 %v1135, %v1261
      %v1298 = vadd.f32 %v1136, %v1266
      %v1299 = vadd.f32 %v1137, %v1269
      %v1300 = vadd.f32 %v1138, %v1274
      %v1301 = vadd.f32 %v1139, %v1277
      %v1302 = vadd.f32 %v1140, %v1282
      %v1303 = vadd.f32 %v1141, %v1285
      %1304 = vrot.lane.b32.xlu0 %v371, 110
      %v1305 = vpop.permute.xlu0 %1304
      %1306 = vrot.lane.b32.xlu0 %v372, 110
      %v1307 = vpop.permute.xlu0 %1306
      %1308 = vrot.lane.b32.xlu0 %v373, 110
      %v1309 = vpop.permute.xlu0 %1308
      %1310 = vrot.lane.b32.xlu0 %v374, 110
      %v1311 = vpop.permute.xlu0 %1310
      %1312 = vrot.lane.b32.xlu0 %v375, 110
      %v1313 = vpop.permute.xlu0 %1312
      %1314 = vrot.lane.b32.xlu0 %v376, 110
      %v1315 = vpop.permute.xlu0 %1314
      %1316 = vrot.lane.b32.xlu0 %v377, 110
      %v1317 = vpop.permute.xlu0 %1316
      %1318 = vrot.lane.b32.xlu0 %v378, 110
      %v1319 = vpop.permute.xlu0 %1318
      %1320 = vrot.lane.b32.xlu0 %v321, 92
      %v1321 = vpop.permute.xlu0 %1320
      %1322 = vrot.lane.b32.xlu0 %v322, 92
      %v1323 = vpop.permute.xlu0 %1322
      %vm1324 = vcmask 752640
      %v1325 = vsel %vm1324, %v1321, %v1323
      %v1327 = vsel %vm403, %v1305, 0
      %v1330 = vsel %vm403, %v1307, 0
      %v1333 = vsel %vm403, %v1309, 0
      %v1336 = vsel %vm403, %v1311, 0
      %v1339 = vsel %vm403, %v1313, 0
      %v1342 = vsel %vm403, %v1315, 0
      %v1345 = vsel %vm403, %v1317, 0
      %v1348 = vsel %vm403, %v1319, 0
      %v1351 = vand.u32 %v1325, %v431
      %1353 = vmatprep.subr.bf16.mxu0 0
      %1354 = vmatpush1.bf16.msra.mxu0 %v1351
      %1355 = vmatprep.subr.bf16.mxu0 0
      %1356 = vmatpush1.bf16.msra.mxu0 0
      %1357 = vmatprep.subr.bf16.mxu0 0
      %1358 = vmatpush1.bf16.msra.mxu0 0
      %1359 = vmatprep.subr.bf16.mxu0 0
      %1360 = vmatpush1.bf16.msra.mxu0 0
      %1361 = vmatprep.subr.bf16.mxu0 0
      %1362 = vmatpush1.bf16.msra.mxu0 0
      %1363 = vmatprep.subr.bf16.mxu0 0
      %1364 = vmatpush1.bf16.msra.mxu0 0
      %1365 = vmatprep.subr.bf16.mxu0 0
      %1366 = vmatpush1.bf16.msra.mxu0 0
      %1367 = vmatprep.subr.bf16.mxu0 0
      %1368 = vmatpush1.bf16.msra.mxu0 0
      %1369 = vmatprep.subr.bf16.mxu0 0
      %1370 = vmatpush1.bf16.msra.mxu0 0
      %1371 = vmatprep.subr.bf16.mxu0 0
      %1372 = vmatpush1.bf16.msra.mxu0 0
      %1373 = vmatprep.subr.bf16.mxu0 0
      %1374 = vmatpush1.bf16.msra.mxu0 0
      %1375 = vmatprep.subr.bf16.mxu0 0
      %1376 = vmatpush1.bf16.msra.mxu0 0
      %1377 = vmatprep.subr.bf16.mxu0 0
      %1378 = vmatpush1.bf16.msra.mxu0 0
      %1379 = vmatprep.subr.bf16.mxu0 0
      %1380 = vmatpush1.bf16.msra.mxu0 0
      %1381 = vmatprep.subr.bf16.mxu0 0
      %1382 = vmatpush1.bf16.msra.mxu0 0
      %1383 = vmatprep.subr.bf16.mxu0 0
      %1384 = vmatpush1.bf16.msra.mxu0 0
      %1385 = vmatprep.mubr.bf16.mxu0 0
      %1386 = vmatmul.mubr.bf16.gmra.mrb[0].mxu0 %v1327
      %v1387 = vpop.f32.mrb[0].mxu0
      %v1388 = vadd.f32 0.0, %v1387
      %v1389 = vpop.f32.mrb[0].mxu0
      %v1390 = vpop.f32.mrb[0].mxu0
      %v1391 = vadd.f32 0.0, %v1390
      %v1392 = vpop.f32.mrb[0].mxu0
      %1393 = vmatprep.mubr.bf16.mxu0 0
      %1394 = vmatmul.mubr.bf16.gmra.mrb[0].mxu0 %v1330
      %v1395 = vpop.f32.mrb[0].mxu0
      %v1396 = vadd.f32 0.0, %v1395
      %v1397 = vpop.f32.mrb[0].mxu0
      %v1398 = vpop.f32.mrb[0].mxu0
      %v1399 = vadd.f32 0.0, %v1398
      %v1400 = vpop.f32.mrb[0].mxu0
      %1401 = vmatprep.mubr.bf16.mxu0 0
      %1402 = vmatmul.mubr.bf16.gmra.mrb[0].mxu0 %v1333
      %v1403 = vpop.f32.mrb[0].mxu0
      %v1404 = vadd.f32 0.0, %v1403
      %v1405 = vpop.f32.mrb[0].mxu0
      %v1406 = vpop.f32.mrb[0].mxu0
      %v1407 = vadd.f32 0.0, %v1406
      %v1408 = vpop.f32.mrb[0].mxu0
      %1409 = vmatprep.mubr.bf16.mxu0 0
      %1410 = vmatmul.mubr.bf16.gmra.mrb[0].mxu0 %v1336
      %v1411 = vpop.f32.mrb[0].mxu0
      %v1412 = vadd.f32 0.0, %v1411
      %v1413 = vpop.f32.mrb[0].mxu0
      %v1414 = vpop.f32.mrb[0].mxu0
      %v1415 = vadd.f32 0.0, %v1414
      %v1416 = vpop.f32.mrb[0].mxu0
      %1417 = vmatprep.mubr.bf16.mxu0 0
      %1418 = vmatmul.mubr.bf16.gmra.mrb[0].mxu0 %v1339
      %v1419 = vpop.f32.mrb[0].mxu0
      %v1420 = vadd.f32 0.0, %v1419
      %v1421 = vpop.f32.mrb[0].mxu0
      %v1422 = vpop.f32.mrb[0].mxu0
      %v1423 = vadd.f32 0.0, %v1422
      %v1424 = vpop.f32.mrb[0].mxu0
      %1425 = vmatprep.mubr.bf16.mxu0 0
      %1426 = vmatmul.mubr.bf16.gmra.mrb[0].mxu0 %v1342
      %v1427 = vpop.f32.mrb[0].mxu0
      %v1428 = vadd.f32 0.0, %v1427
      %v1429 = vpop.f32.mrb[0].mxu0
      %v1430 = vpop.f32.mrb[0].mxu0
      %v1431 = vadd.f32 0.0, %v1430
      %v1432 = vpop.f32.mrb[0].mxu0
      %1433 = vmatprep.mubr.bf16.mxu0 0
      %1434 = vmatmul.mubr.bf16.gmra.mrb[0].mxu0 %v1345
      %v1435 = vpop.f32.mrb[0].mxu0
      %v1436 = vadd.f32 0.0, %v1435
      %v1437 = vpop.f32.mrb[0].mxu0
      %v1438 = vpop.f32.mrb[0].mxu0
      %v1439 = vadd.f32 0.0, %v1438
      %v1440 = vpop.f32.mrb[0].mxu0
      %1441 = vmatprep.mubr.bf16.mxu0 0
      %1442 = vmatmul.mubr.bf16.gmra.mrb[0].mxu0 %v1348
      %v1443 = vpop.f32.mrb[0].mxu0
      %v1444 = vadd.f32 0.0, %v1443
      %v1445 = vpop.f32.mrb[0].mxu0
      %v1446 = vpop.f32.mrb[0].mxu0
      %v1447 = vadd.f32 0.0, %v1446
      %v1448 = vpop.f32.mrb[0].mxu0
      %1449 = vdwg.mxu0
      %v1450 = vadd.f32 %v1288, %v1388
      %v1451 = vadd.f32 %v1289, %v1391
      %v1452 = vadd.f32 %v1290, %v1396
      %v1453 = vadd.f32 %v1291, %v1399
      %v1454 = vadd.f32 %v1292, %v1404
      %v1455 = vadd.f32 %v1293, %v1407
      %v1456 = vadd.f32 %v1294, %v1412
      %v1457 = vadd.f32 %v1295, %v1415
      %v1458 = vadd.f32 %v1296, %v1420
      %v1459 = vadd.f32 %v1297, %v1423
      %v1460 = vadd.f32 %v1298, %v1428
      %v1461 = vadd.f32 %v1299, %v1431
      %v1462 = vadd.f32 %v1300, %v1436
      %v1463 = vadd.f32 %v1301, %v1439
      %v1464 = vadd.f32 %v1302, %v1444
      %v1465 = vadd.f32 %v1303, %v1447
      %1466 = vrot.lane.b32.xlu0 %v371, 107
      %v1467 = vpop.permute.xlu0 %1466
      %1468 = vrot.lane.b32.xlu0 %v372, 107
      %v1469 = vpop.permute.xlu0 %1468
      %1470 = vrot.lane.b32.xlu0 %v373, 107
      %v1471 = vpop.permute.xlu0 %1470
      %1472 = vrot.lane.b32.xlu0 %v374, 107
      %v1473 = vpop.permute.xlu0 %1472
      %1474 = vrot.lane.b32.xlu0 %v375, 107
      %v1475 = vpop.permute.xlu0 %1474
      %1476 = vrot.lane.b32.xlu0 %v376, 107
      %v1477 = vpop.permute.xlu0 %1476
      %1478 = vrot.lane.b32.xlu0 %v377, 107
      %v1479 = vpop.permute.xlu0 %1478
      %1480 = vrot.lane.b32.xlu0 %v378, 107
      %v1481 = vpop.permute.xlu0 %1480
      %1482 = vrot.lane.b32.xlu0 %v321, 91
      %v1483 = vpop.permute.xlu0 %1482
      %1484 = vrot.lane.b32.xlu0 %v322, 91
      %v1485 = vpop.permute.xlu0 %1484
      %vm1486 = vcmask 744448
      %v1487 = vsel %vm1486, %v1483, %v1485
      %v1489 = vsel %vm403, %v1467, 0
      %v1492 = vsel %vm403, %v1469, 0
      %v1495 = vsel %vm403, %v1471, 0
      %v1498 = vsel %vm403, %v1473, 0
      %v1501 = vsel %vm403, %v1475, 0
      %v1504 = vsel %vm403, %v1477, 0
      %v1507 = vsel %vm403, %v1479, 0
      %v1510 = vsel %vm403, %v1481, 0
      %v1513 = vand.u32 %v1487, %v431
      %1515 = vmatprep.subr.bf16.mxu0 0
      %1516 = vmatpush1.bf16.msra.mxu0 %v1513
      %1517 = vmatprep.subr.bf16.mxu0 0
      %1518 = vmatpush1.bf16.msra.mxu0 0
      %1519 = vmatprep.subr.bf16.mxu0 0
      %1520 = vmatpush1.bf16.msra.mxu0 0
      %1521 = vmatprep.subr.bf16.mxu0 0
      %1522 = vmatpush1.bf16.msra.mxu0 0
      %1523 = vmatprep.subr.bf16.mxu0 0
      %1524 = vmatpush1.bf16.msra.mxu0 0
      %1525 = vmatprep.subr.bf16.mxu0 0
      %1526 = vmatpush1.bf16.msra.mxu0 0
      %1527 = vmatprep.subr.bf16.mxu0 0
      %1528 = vmatpush1.bf16.msra.mxu0 0
      %1529 = vmatprep.subr.bf16.mxu0 0
      %1530 = vmatpush1.bf16.msra.mxu0 0
      %1531 = vmatprep.subr.bf16.mxu0 0
      %1532 = vmatpush1.bf16.msra.mxu0 0
      %1533 = vmatprep.subr.bf16.mxu0 0
      %1534 = vmatpush1.bf16.msra.mxu0 0
      %1535 = vmatprep.subr.bf16.mxu0 0
      %1536 = vmatpush1.bf16.msra.mxu0 0
      %1537 = vmatprep.subr.bf16.mxu0 0
      %1538 = vmatpush1.bf16.msra.mxu0 0
      %1539 = vmatprep.subr.bf16.mxu0 0
      %1540 = vmatpush1.bf16.msra.mxu0 0
      %1541 = vmatprep.subr.bf16.mxu0 0
      %1542 = vmatpush1.bf16.msra.mxu0 0
      %1543 = vmatprep.subr.bf16.mxu0 0
      %1544 = vmatpush1.bf16.msra.mxu0 0
      %1545 = vmatprep.subr.bf16.mxu0 0
      %1546 = vmatpush1.bf16.msra.mxu0 0
      %1547 = vmatprep.mubr.bf16.mxu0 0
      %1548 = vmatmul.mubr.bf16.gmra.mrb[0].mxu0 %v1489
      %v1549 = vpop.f32.mrb[0].mxu0
      %v1550 = vadd.f32 0.0, %v1549
      %v1551 = vpop.f32.mrb[0].mxu0
      %v1552 = vpop.f32.mrb[0].mxu0
      %v1553 = vadd.f32 0.0, %v1552
      %v1554 = vpop.f32.mrb[0].mxu0
      %1555 = vmatprep.mubr.bf16.mxu0 0
      %1556 = vmatmul.mubr.bf16.gmra.mrb[0].mxu0 %v1492
      %v1557 = vpop.f32.mrb[0].mxu0
      %v1558 = vadd.f32 0.0, %v1557
      %v1559 = vpop.f32.mrb[0].mxu0
      %v1560 = vpop.f32.mrb[0].mxu0
      %v1561 = vadd.f32 0.0, %v1560
      %v1562 = vpop.f32.mrb[0].mxu0
      %1563 = vmatprep.mubr.bf16.mxu0 0
      %1564 = vmatmul.mubr.bf16.gmra.mrb[0].mxu0 %v1495
      %v1565 = vpop.f32.mrb[0].mxu0
      %v1566 = vadd.f32 0.0, %v1565
      %v1567 = vpop.f32.mrb[0].mxu0
      %v1568 = vpop.f32.mrb[0].mxu0
      %v1569 = vadd.f32 0.0, %v1568
      %v1570 = vpop.f32.mrb[0].mxu0
      %1571 = vmatprep.mubr.bf16.mxu0 0
      %1572 = vmatmul.mubr.bf16.gmra.mrb[0].mxu0 %v1498
      %v1573 = vpop.f32.mrb[0].mxu0
      %v1574 = vadd.f32 0.0, %v1573
      %v1575 = vpop.f32.mrb[0].mxu0
      %v1576 = vpop.f32.mrb[0].mxu0
      %v1577 = vadd.f32 0.0, %v1576
      %v1578 = vpop.f32.mrb[0].mxu0
      %1579 = vmatprep.mubr.bf16.mxu0 0
      %1580 = vmatmul.mubr.bf16.gmra.mrb[0].mxu0 %v1501
      %v1581 = vpop.f32.mrb[0].mxu0
      %v1582 = vadd.f32 0.0, %v1581
      %v1583 = vpop.f32.mrb[0].mxu0
      %v1584 = vpop.f32.mrb[0].mxu0
      %v1585 = vadd.f32 0.0, %v1584
      %v1586 = vpop.f32.mrb[0].mxu0
      %1587 = vmatprep.mubr.bf16.mxu0 0
      %1588 = vmatmul.mubr.bf16.gmra.mrb[0].mxu0 %v1504
      %v1589 = vpop.f32.mrb[0].mxu0
      %v1590 = vadd.f32 0.0, %v1589
      %v1591 = vpop.f32.mrb[0].mxu0
      %v1592 = vpop.f32.mrb[0].mxu0
      %v1593 = vadd.f32 0.0, %v1592
      %v1594 = vpop.f32.mrb[0].mxu0
      %1595 = vmatprep.mubr.bf16.mxu0 0
      %1596 = vmatmul.mubr.bf16.gmra.mrb[0].mxu0 %v1507
      %v1597 = vpop.f32.mrb[0].mxu0
      %v1598 = vadd.f32 0.0, %v1597
      %v1599 = vpop.f32.mrb[0].mxu0
      %v1600 = vpop.f32.mrb[0].mxu0
      %v1601 = vadd.f32 0.0, %v1600
      %v1602 = vpop.f32.mrb[0].mxu0
      %1603 = vmatprep.mubr.bf16.mxu0 0
      %1604 = vmatmul.mubr.bf16.gmra.mrb[0].mxu0 %v1510
      %v1605 = vpop.f32.mrb[0].mxu0
      %v1606 = vadd.f32 0.0, %v1605
      %v1607 = vpop.f32.mrb[0].mxu0
      %v1608 = vpop.f32.mrb[0].mxu0
      %v1609 = vadd.f32 0.0, %v1608
      %v1610 = vpop.f32.mrb[0].mxu0
      %1611 = vdwg.mxu0
      %v1612 = vadd.f32 %v1450, %v1550
      %v1613 = vadd.f32 %v1451, %v1553
      %v1614 = vadd.f32 %v1452, %v1558
      %v1615 = vadd.f32 %v1453, %v1561
      %v1616 = vadd.f32 %v1454, %v1566
      %v1617 = vadd.f32 %v1455, %v1569
      %v1618 = vadd.f32 %v1456, %v1574
      %v1619 = vadd.f32 %v1457, %v1577
      %v1620 = vadd.f32 %v1458, %v1582
      %v1621 = vadd.f32 %v1459, %v1585
      %v1622 = vadd.f32 %v1460, %v1590
      %v1623 = vadd.f32 %v1461, %v1593
      %v1624 = vadd.f32 %v1462, %v1598
      %v1625 = vadd.f32 %v1463, %v1601
      %v1626 = vadd.f32 %v1464, %v1606
      %v1627 = vadd.f32 %v1465, %v1609
      %1628 = vrot.lane.b32.xlu0 %v371, 104
      %v1629 = vpop.permute.xlu0 %1628
      %1630 = vrot.lane.b32.xlu0 %v372, 104
      %v1631 = vpop.permute.xlu0 %1630
      %1632 = vrot.lane.b32.xlu0 %v373, 104
      %v1633 = vpop.permute.xlu0 %1632
      %1634 = vrot.lane.b32.xlu0 %v374, 104
      %v1635 = vpop.permute.xlu0 %1634
      %1636 = vrot.lane.b32.xlu0 %v375, 104
      %v1637 = vpop.permute.xlu0 %1636
      %1638 = vrot.lane.b32.xlu0 %v376, 104
      %v1639 = vpop.permute.xlu0 %1638
      %1640 = vrot.lane.b32.xlu0 %v377, 104
      %v1641 = vpop.permute.xlu0 %1640
      %1642 = vrot.lane.b32.xlu0 %v378, 104
      %v1643 = vpop.permute.xlu0 %1642
      %1644 = vrot.lane.b32.xlu0 %v321, 90
      %v1645 = vpop.permute.xlu0 %1644
      %1646 = vrot.lane.b32.xlu0 %v322, 90
      %v1647 = vpop.permute.xlu0 %1646
      %vm1648 = vcmask 736256
      %v1649 = vsel %vm1648, %v1645, %v1647
      %v1651 = vsel %vm403, %v1629, 0
      %v1654 = vsel %vm403, %v1631, 0
      %v1657 = vsel %vm403, %v1633, 0
      %v1660 = vsel %vm403, %v1635, 0
      %v1663 = vsel %vm403, %v1637, 0
      %v1666 = vsel %vm403, %v1639, 0
      %v1669 = vsel %vm403, %v1641, 0
      %v1672 = vsel %vm403, %v1643, 0
      %v1675 = vand.u32 %v1649, %v431
      %1677 = vmatprep.subr.bf16.mxu0 0
      %1678 = vmatpush1.bf16.msra.mxu0 %v1675
      %1679 = vmatprep.subr.bf16.mxu0 0
      %1680 = vmatpush1.bf16.msra.mxu0 0
      %1681 = vmatprep.subr.bf16.mxu0 0
      %1682 = vmatpush1.bf16.msra.mxu0 0
      %1683 = vmatprep.subr.bf16.mxu0 0
      %1684 = vmatpush1.bf16.msra.mxu0 0
      %1685 = vmatprep.subr.bf16.mxu0 0
      %1686 = vmatpush1.bf16.msra.mxu0 0
      %1687 = vmatprep.subr.bf16.mxu0 0
      %1688 = vmatpush1.bf16.msra.mxu0 0
      %1689 = vmatprep.subr.bf16.mxu0 0
      %1690 = vmatpush1.bf16.msra.mxu0 0
      %1691 = vmatprep.subr.bf16.mxu0 0
      %1692 = vmatpush1.bf16.msra.mxu0 0
      %1693 = vmatprep.subr.bf16.mxu0 0
      %1694 = vmatpush1.bf16.msra.mxu0 0
      %1695 = vmatprep.subr.bf16.mxu0 0
      %1696 = vmatpush1.bf16.msra.mxu0 0
      %1697 = vmatprep.subr.bf16.mxu0 0
      %1698 = vmatpush1.bf16.msra.mxu0 0
      %1699 = vmatprep.subr.bf16.mxu0 0
      %1700 = vmatpush1.bf16.msra.mxu0 0
      %1701 = vmatprep.subr.bf16.mxu0 0
      %1702 = vmatpush1.bf16.msra.mxu0 0
      %1703 = vmatprep.subr.bf16.mxu0 0
      %1704 = vmatpush1.bf16.msra.mxu0 0
      %1705 = vmatprep.subr.bf16.mxu0 0
      %1706 = vmatpush1.bf16.msra.mxu0 0
      %1707 = vmatprep.subr.bf16.mxu0 0
      %1708 = vmatpush1.bf16.msra.mxu0 0
      %1709 = vmatprep.mubr.bf16.mxu0 0
      %1710 = vmatmul.mubr.bf16.gmra.mrb[0].mxu0 %v1651
      %v1711 = vpop.f32.mrb[0].mxu0
      %v1712 = vadd.f32 0.0, %v1711
      %v1713 = vpop.f32.mrb[0].mxu0
      %v1714 = vpop.f32.mrb[0].mxu0
      %v1715 = vadd.f32 0.0, %v1714
      %v1716 = vpop.f32.mrb[0].mxu0
      %1717 = vmatprep.mubr.bf16.mxu0 0
      %1718 = vmatmul.mubr.bf16.gmra.mrb[0].mxu0 %v1654
      %v1719 = vpop.f32.mrb[0].mxu0
      %v1720 = vadd.f32 0.0, %v1719
      %v1721 = vpop.f32.mrb[0].mxu0
      %v1722 = vpop.f32.mrb[0].mxu0
      %v1723 = vadd.f32 0.0, %v1722
      %v1724 = vpop.f32.mrb[0].mxu0
      %1725 = vmatprep.mubr.bf16.mxu0 0
      %1726 = vmatmul.mubr.bf16.gmra.mrb[0].mxu0 %v1657
      %v1727 = vpop.f32.mrb[0].mxu0
      %v1728 = vadd.f32 0.0, %v1727
      %v1729 = vpop.f32.mrb[0].mxu0
      %v1730 = vpop.f32.mrb[0].mxu0
      %v1731 = vadd.f32 0.0, %v1730
      %v1732 = vpop.f32.mrb[0].mxu0
      %1733 = vmatprep.mubr.bf16.mxu0 0
      %1734 = vmatmul.mubr.bf16.gmra.mrb[0].mxu0 %v1660
      %v1735 = vpop.f32.mrb[0].mxu0
      %v1736 = vadd.f32 0.0, %v1735
      %v1737 = vpop.f32.mrb[0].mxu0
      %v1738 = vpop.f32.mrb[0].mxu0
      %v1739 = vadd.f32 0.0, %v1738
      %v1740 = vpop.f32.mrb[0].mxu0
      %1741 = vmatprep.mubr.bf16.mxu0 0
      %1742 = vmatmul.mubr.bf16.gmra.mrb[0].mxu0 %v1663
      %v1743 = vpop.f32.mrb[0].mxu0
      %v1744 = vadd.f32 0.0, %v1743
      %v1745 = vpop.f32.mrb[0].mxu0
      %v1746 = vpop.f32.mrb[0].mxu0
      %v1747 = vadd.f32 0.0, %v1746
      %v1748 = vpop.f32.mrb[0].mxu0
      %1749 = vmatprep.mubr.bf16.mxu0 0
      %1750 = vmatmul.mubr.bf16.gmra.mrb[0].mxu0 %v1666
      %v1751 = vpop.f32.mrb[0].mxu0
      %v1752 = vadd.f32 0.0, %v1751
      %v1753 = vpop.f32.mrb[0].mxu0
      %v1754 = vpop.f32.mrb[0].mxu0
      %v1755 = vadd.f32 0.0, %v1754
      %v1756 = vpop.f32.mrb[0].mxu0
      %1757 = vmatprep.mubr.bf16.mxu0 0
      %1758 = vmatmul.mubr.bf16.gmra.mrb[0].mxu0 %v1669
      %v1759 = vpop.f32.mrb[0].mxu0
      %v1760 = vadd.f32 0.0, %v1759
      %v1761 = vpop.f32.mrb[0].mxu0
      %v1762 = vpop.f32.mrb[0].mxu0
      %v1763 = vadd.f32 0.0, %v1762
      %v1764 = vpop.f32.mrb[0].mxu0
      %1765 = vmatprep.mubr.bf16.mxu0 0
      %1766 = vmatmul.mubr.bf16.gmra.mrb[0].mxu0 %v1672
      %v1767 = vpop.f32.mrb[0].mxu0
      %v1768 = vadd.f32 0.0, %v1767
      %v1769 = vpop.f32.mrb[0].mxu0
      %v1770 = vpop.f32.mrb[0].mxu0
      %v1771 = vadd.f32 0.0, %v1770
      %v1772 = vpop.f32.mrb[0].mxu0
      %1773 = vdwg.mxu0
      %v1774 = vadd.f32 %v1612, %v1712
      %v1775 = vadd.f32 %v1613, %v1715
      %v1776 = vadd.f32 %v1614, %v1720
      %v1777 = vadd.f32 %v1615, %v1723
      %v1778 = vadd.f32 %v1616, %v1728
      %v1779 = vadd.f32 %v1617, %v1731
      %v1780 = vadd.f32 %v1618, %v1736
      %v1781 = vadd.f32 %v1619, %v1739
      %v1782 = vadd.f32 %v1620, %v1744
      %v1783 = vadd.f32 %v1621, %v1747
      %v1784 = vadd.f32 %v1622, %v1752
      %v1785 = vadd.f32 %v1623, %v1755
      %v1786 = vadd.f32 %v1624, %v1760
      %v1787 = vadd.f32 %v1625, %v1763
      %v1788 = vadd.f32 %v1626, %v1768
      %v1789 = vadd.f32 %v1627, %v1771
      %v1790 = vld [vmem:[%s4] sm:$0xff]
      %v1791 = vld [vmem:[%s4 + $0x8] sm:$0xff]
      %v1792 = vld [vmem:[%s4 + $0x10] sm:$0xff]
      %v1793 = vld [vmem:[%s4 + $0x18] sm:$0xff]
      %v1794 = vld [vmem:[%s4 + $0x20] sm:$0xff]
      %v1795 = vld [vmem:[%s4 + $0x28] sm:$0xff]
      %v1796 = vld [vmem:[%s4 + $0x30] sm:$0xff]
      %v1797 = vld [vmem:[%s4 + $0x38] sm:$0xff]
      %v1798 = vld [vmem:[%s4 + $0x40] sm:$0xff]
      %v1799 = vld [vmem:[%s4 + $0x48] sm:$0xff]
      %v1800 = vld [vmem:[%s4 + $0x50] sm:$0xff]
      %v1801 = vld [vmem:[%s4 + $0x58] sm:$0xff]
      %v1802 = vld [vmem:[%s4 + $0x60] sm:$0xff]
      %v1803 = vld [vmem:[%s4 + $0x68] sm:$0xff]
      %v1804 = vld [vmem:[%s4 + $0x70] sm:$0xff]
      %v1805 = vld [vmem:[%s4 + $0x78] sm:$0xff]
      %1807 = vset.pattern.permute.xlu0 0
      %1808 = vperm.xlu0 %1807, %v1790
      %v1809 = vpop.permute.xlu0 %1808
      %1812 = vset.pattern.permute.xlu0 0
      %1813 = vperm.xlu0 %1812, %v1791
      %v1814 = vpop.permute.xlu0 %1813
      %1817 = vset.pattern.permute.xlu0 0
      %1818 = vperm.xlu0 %1817, %v1792
      %v1819 = vpop.permute.xlu0 %1818
      %1822 = vset.pattern.permute.xlu0 0
      %1823 = vperm.xlu0 %1822, %v1793
      %v1824 = vpop.permute.xlu0 %1823
      %1827 = vset.pattern.permute.xlu0 0
      %1828 = vperm.xlu0 %1827, %v1794
      %v1829 = vpop.permute.xlu0 %1828
      %1832 = vset.pattern.permute.xlu0 0
      %1833 = vperm.xlu0 %1832, %v1795
      %v1834 = vpop.permute.xlu0 %1833
      %1837 = vset.pattern.permute.xlu0 0
      %1838 = vperm.xlu0 %1837, %v1796
      %v1839 = vpop.permute.xlu0 %1838
      %1842 = vset.pattern.permute.xlu0 0
      %1843 = vperm.xlu0 %1842, %v1797
      %v1844 = vpop.permute.xlu0 %1843
      %1847 = vset.pattern.permute.xlu0 0
      %1848 = vperm.xlu0 %1847, %v1798
      %v1849 = vpop.permute.xlu0 %1848
      %1852 = vset.pattern.permute.xlu0 0
      %1853 = vperm.xlu0 %1852, %v1799
      %v1854 = vpop.permute.xlu0 %1853
      %1857 = vset.pattern.permute.xlu0 0
      %1858 = vperm.xlu0 %1857, %v1800
      %v1859 = vpop.permute.xlu0 %1858
      %1862 = vset.pattern.permute.xlu0 0
      %1863 = vperm.xlu0 %1862, %v1801
      %v1864 = vpop.permute.xlu0 %1863
      %1867 = vset.pattern.permute.xlu0 0
      %1868 = vperm.xlu0 %1867, %v1802
      %v1869 = vpop.permute.xlu0 %1868
      %1872 = vset.pattern.permute.xlu0 0
      %1873 = vperm.xlu0 %1872, %v1803
      %v1874 = vpop.permute.xlu0 %1873
      %1877 = vset.pattern.permute.xlu0 0
      %1878 = vperm.xlu0 %1877, %v1804
      %v1879 = vpop.permute.xlu0 %1878
      %1882 = vset.pattern.permute.xlu0 0
      %1883 = vperm.xlu0 %1882, %v1805
      %v1884 = vpop.permute.xlu0 %1883
      %v1886 = vadd.f32 %v1774, %v1809
      %v1887 = vadd.f32 %v1775, %v1814
      %v1888 = vadd.f32 %v1776, %v1819
      %v1889 = vadd.f32 %v1777, %v1824
      %v1890 = vadd.f32 %v1778, %v1829
      %v1891 = vadd.f32 %v1779, %v1834
      %v1892 = vadd.f32 %v1780, %v1839
      %v1893 = vadd.f32 %v1781, %v1844
      %v1894 = vadd.f32 %v1782, %v1849
      %v1895 = vadd.f32 %v1783, %v1854
      %v1896 = vadd.f32 %v1784, %v1859
      %v1897 = vadd.f32 %v1785, %v1864
      %v1898 = vadd.f32 %v1786, %v1869
      %v1899 = vadd.f32 %v1787, %v1874
      %v1900 = vadd.f32 %v1788, %v1879
      %v1901 = vadd.f32 %v1789, %v1884
      %v1902 = vmax.f32 %v1886, 0.0
      %v1903 = vmax.f32 %v1887, 0.0
      %v1904 = vmax.f32 %v1888, 0.0
      %v1905 = vmax.f32 %v1889, 0.0
      %v1906 = vmax.f32 %v1890, 0.0
      %v1907 = vmax.f32 %v1891, 0.0
      %v1908 = vmax.f32 %v1892, 0.0
      %v1909 = vmax.f32 %v1893, 0.0
      %v1910 = vmax.f32 %v1894, 0.0
      %v1911 = vmax.f32 %v1895, 0.0
      %v1912 = vmax.f32 %v1896, 0.0
      %v1913 = vmax.f32 %v1897, 0.0
      %v1914 = vmax.f32 %v1898, 0.0
      %v1915 = vmax.f32 %v1899, 0.0
      %v1916 = vmax.f32 %v1900, 0.0
      %v1917 = vmax.f32 %v1901, 0.0
      %v1918 = vld [vmem:[%s276] sm:$0x1]
      %v1920 = vlaneseq
      %v1921 = vshrl.u32 %v1920, 7
      %v1922 = vsub.s32 0, %v1921
      %v1923 = vrot.slane %v1918, %v1922
      %v1925 = vmul.f32 %v1902, %v1923
      %v1926 = vmul.f32 %v1903, %v1923
      %v1927 = vmul.f32 %v1904, %v1923
      %v1928 = vmul.f32 %v1905, %v1923
      %v1929 = vmul.f32 %v1906, %v1923
      %v1930 = vmul.f32 %v1907, %v1923
      %v1931 = vmul.f32 %v1908, %v1923
      %v1932 = vmul.f32 %v1909, %v1923
      %v1933 = vmul.f32 %v1910, %v1923
      %v1934 = vmul.f32 %v1911, %v1923
      %v1935 = vmul.f32 %v1912, %v1923
      %v1936 = vmul.f32 %v1913, %v1923
      %v1937 = vmul.f32 %v1914, %v1923
      %v1938 = vmul.f32 %v1915, %v1923
      %v1939 = vmul.f32 %v1916, %v1923
      %v1940 = vmul.f32 %v1917, %v1923
      %v1941 = vld [vmem:[#allocation2] sm:$0xff]
      %v1942 = vld [vmem:[#allocation2 + $0x8] sm:$0xff]
      %v1943 = vld [vmem:[#allocation2 + $0x10] sm:$0xff]
      %v1944 = vld [vmem:[#allocation2 + $0x18] sm:$0xff]
      %v1945 = vld [vmem:[#allocation2 + $0x20] sm:$0xff]
      %v1946 = vld [vmem:[#allocation2 + $0x28] sm:$0xff]
      %v1947 = vld [vmem:[#allocation2 + $0x30] sm:$0xff]
      %v1948 = vld [vmem:[#allocation2 + $0x38] sm:$0xff]
      %v1949 = vld [vmem:[#allocation2 + $0x40] sm:$0xff]
      %v1950 = vld [vmem:[#allocation2 + $0x48] sm:$0xff]
      %v1951 = vld [vmem:[#allocation2 + $0x50] sm:$0xff]
      %v1952 = vld [vmem:[#allocation2 + $0x58] sm:$0xff]
      %v1953 = vld [vmem:[#allocation2 + $0x60] sm:$0xff]
      %v1954 = vld [vmem:[#allocation2 + $0x68] sm:$0xff]
      %v1955 = vld [vmem:[#allocation2 + $0x70] sm:$0xff]
      %v1956 = vld [vmem:[#allocation2 + $0x78] sm:$0xff]
      %v1957 = vadd.f32 %v1941, %v1925
      %v1958 = vadd.f32 %v1942, %v1926
      %v1959 = vadd.f32 %v1943, %v1927
      %v1960 = vadd.f32 %v1944, %v1928
      %v1961 = vadd.f32 %v1945, %v1929
      %v1962 = vadd.f32 %v1946, %v1930
      %v1963 = vadd.f32 %v1947, %v1931
      %v1964 = vadd.f32 %v1948, %v1932
      %v1965 = vadd.f32 %v1949, %v1933
      %v1966 = vadd.f32 %v1950, %v1934
      %v1967 = vadd.f32 %v1951, %v1935
      %v1968 = vadd.f32 %v1952, %v1936
      %v1969 = vadd.f32 %v1953, %v1937
      %v1970 = vadd.f32 %v1954, %v1938
      %v1971 = vadd.f32 %v1955, %v1939
      %v1972 = vadd.f32 %v1956, %v1940
      %1973 = vst [vmem:[#allocation2] sm:$0xff] %v1957
      %1974 = vst [vmem:[#allocation2 + $0x8] sm:$0xff] %v1958
      %1975 = vst [vmem:[#allocation2 + $0x10] sm:$0xff] %v1959
      %1976 = vst [vmem:[#allocation2 + $0x18] sm:$0xff] %v1960
      %1977 = vst [vmem:[#allocation2 + $0x20] sm:$0xff] %v1961
      %1978 = vst [vmem:[#allocation2 + $0x28] sm:$0xff] %v1962
      %1979 = vst [vmem:[#allocation2 + $0x30] sm:$0xff] %v1963
      %1980 = vst [vmem:[#allocation2 + $0x38] sm:$0xff] %v1964
      %1981 = vst [vmem:[#allocation2 + $0x40] sm:$0xff] %v1965
      %1982 = vst [vmem:[#allocation2 + $0x48] sm:$0xff] %v1966
      %1983 = vst [vmem:[#allocation2 + $0x50] sm:$0xff] %v1967
      %1984 = vst [vmem:[#allocation2 + $0x58] sm:$0xff] %v1968
      %1985 = vst [vmem:[#allocation2 + $0x60] sm:$0xff] %v1969
      %1986 = vst [vmem:[#allocation2 + $0x68] sm:$0xff] %v1970
      %1987 = vst [vmem:[#allocation2 + $0x70] sm:$0xff] %v1971
      %1988 = vst [vmem:[#allocation2 + $0x78] sm:$0xff] %v1972
      %p1989 = scmp.eq.s32.totalorder %s21, 2
      // Predicated region
      $region45: #{animal_model_forward.2} parent=39 // pred_check
        %p1990 = pneg %p1989
      $region46: #{animal_model_forward.2} parent=39 // pred_check_branch
        %1992 = sbr.rel (%p1990) target = $region48
      $region47: #{animal_model_forward.2} parent=39 // pred_region
        %v1993 = vld [vmem:[#allocation2] sm:$0xff]
        %v1994 = vld [vmem:[#allocation2 + $0x8] sm:$0xff]
        %v1995 = vld [vmem:[#allocation2 + $0x10] sm:$0xff]
        %v1996 = vld [vmem:[#allocation2 + $0x18] sm:$0xff]
        %v1997 = vld [vmem:[#allocation2 + $0x20] sm:$0xff]
        %v1998 = vld [vmem:[#allocation2 + $0x28] sm:$0xff]
        %v1999 = vld [vmem:[#allocation2 + $0x30] sm:$0xff]
        %v2000 = vld [vmem:[#allocation2 + $0x38] sm:$0xff]
        %v2001 = vld [vmem:[#allocation2 + $0x40] sm:$0xff]
        %v2002 = vld [vmem:[#allocation2 + $0x48] sm:$0xff]
        %v2003 = vld [vmem:[#allocation2 + $0x50] sm:$0xff]
        %v2004 = vld [vmem:[#allocation2 + $0x58] sm:$0xff]
        %v2005 = vld [vmem:[#allocation2 + $0x60] sm:$0xff]
        %v2006 = vld [vmem:[#allocation2 + $0x68] sm:$0xff]
        %v2007 = vld [vmem:[#allocation2 + $0x70] sm:$0xff]
        %v2008 = vld [vmem:[#allocation2 + $0x78] sm:$0xff]
        %2009 = vadd.xlane.f32.xlu0 %v1993
        %v2010 = vpop.xlane.xlu0 %2009
        %2011 = vadd.xlane.f32.xlu0 %v1994
        %v2012 = vpop.xlane.xlu0 %2011
        %2013 = vadd.xlane.f32.xlu0 %v1995
        %v2014 = vpop.xlane.xlu0 %2013
        %2015 = vadd.xlane.f32.xlu0 %v1996
        %v2016 = vpop.xlane.xlu0 %2015
        %2017 = vadd.xlane.f32.xlu0 %v1997
        %v2018 = vpop.xlane.xlu0 %2017
        %2019 = vadd.xlane.f32.xlu0 %v1998
        %v2020 = vpop.xlane.xlu0 %2019
        %2021 = vadd.xlane.f32.xlu0 %v1999
        %v2022 = vpop.xlane.xlu0 %2021
        %2023 = vadd.xlane.f32.xlu0 %v2000
        %v2024 = vpop.xlane.xlu0 %2023
        %2025 = vadd.xlane.f32.xlu0 %v2001
        %v2026 = vpop.xlane.xlu0 %2025
        %2027 = vadd.xlane.f32.xlu0 %v2002
        %v2028 = vpop.xlane.xlu0 %2027
        %2029 = vadd.xlane.f32.xlu0 %v2003
        %v2030 = vpop.xlane.xlu0 %2029
        %2031 = vadd.xlane.f32.xlu0 %v2004
        %v2032 = vpop.xlane.xlu0 %2031
        %2033 = vadd.xlane.f32.xlu0 %v2005
        %v2034 = vpop.xlane.xlu0 %2033
        %2035 = vadd.xlane.f32.xlu0 %v2006
        %v2036 = vpop.xlane.xlu0 %2035
        %2037 = vadd.xlane.f32.xlu0 %v2007
        %v2038 = vpop.xlane.xlu0 %2037
        %2039 = vadd.xlane.f32.xlu0 %v2008
        %v2040 = vpop.xlane.xlu0 %2039
        %v2041 = vmul.f32 %v2010, 0.00390625
        %v2042 = vmul.f32 %v2012, 0.00390625
        %v2043 = vmul.f32 %v2014, 0.00390625
        %v2044 = vmul.f32 %v2016, 0.00390625
        %v2045 = vmul.f32 %v2018, 0.00390625
        %v2046 = vmul.f32 %v2020, 0.00390625
        %v2047 = vmul.f32 %v2022, 0.00390625
        %v2048 = vmul.f32 %v2024, 0.00390625
        %v2049 = vmul.f32 %v2026, 0.00390625
        %v2050 = vmul.f32 %v2028, 0.00390625
        %v2051 = vmul.f32 %v2030, 0.00390625
        %v2052 = vmul.f32 %v2032, 0.00390625
        %v2053 = vmul.f32 %v2034, 0.00390625
        %v2054 = vmul.f32 %v2036, 0.00390625
        %v2055 = vmul.f32 %v2038, 0.00390625
        %v2056 = vmul.f32 %v2040, 0.00390625
        %vm2057 = vcmask 7168
        %2058 = vst.msk [vmem:[%s299] sm:$0xff] %vm2057, %v2041
        %2059 = vst.msk [vmem:[%s299 + $0x8] sm:$0xff] %vm2057, %v2042
        %2060 = vst.msk [vmem:[%s299 + $0x10] sm:$0xff] %vm2057, %v2043
        %2061 = vst.msk [vmem:[%s299 + $0x18] sm:$0xff] %vm2057, %v2044
        %2062 = vst.msk [vmem:[%s299 + $0x20] sm:$0xff] %vm2057, %v2045
        %2063 = vst.msk [vmem:[%s299 + $0x28] sm:$0xff] %vm2057, %v2046
        %2064 = vst.msk [vmem:[%s299 + $0x30] sm:$0xff] %vm2057, %v2047
        %2065 = vst.msk [vmem:[%s299 + $0x38] sm:$0xff] %vm2057, %v2048
        %2066 = vst.msk [vmem:[%s299 + $0x40] sm:$0xff] %vm2057, %v2049
        %2067 = vst.msk [vmem:[%s299 + $0x48] sm:$0xff] %vm2057, %v2050
        %2068 = vst.msk [vmem:[%s299 + $0x50] sm:$0xff] %vm2057, %v2051
        %2069 = vst.msk [vmem:[%s299 + $0x58] sm:$0xff] %vm2057, %v2052
        %2070 = vst.msk [vmem:[%s299 + $0x60] sm:$0xff] %vm2057, %v2053
        %2071 = vst.msk [vmem:[%s299 + $0x68] sm:$0xff] %vm2057, %v2054
        %2072 = vst.msk [vmem:[%s299 + $0x70] sm:$0xff] %vm2057, %v2055
        %2073 = vst.msk [vmem:[%s299 + $0x78] sm:$0xff] %vm2057, %v2056
      $region48: #{animal_model_forward.2} parent=39 // pred_fallthru
        _
      %p2074 = scmp.lt.s32.totalorder %s20, 1
      %s2075 = scalar_select %p2074, %s20, 1
      %s2076 = smul.addr %s2075, 16
      %s2077 = smul.addr %s2076, 8
      %s2078 = scalar_lea.vmem %s5, %s2077
      // Predicated region
      $region49: #{animal_model_forward.2} parent=39 // pred_check
        %p2079 = pneg %p172
      $region50: #{animal_model_forward.2} parent=39 // pred_check_branch
        %2081 = sbr.rel (%p2079) target = $region52
      $region51: #{animal_model_forward.2} parent=39 // pred_region
        _
      $region52: #{animal_model_forward.2} parent=39 // pred_fallthru
        _
    $region40: #{animal_model_forward.2} parent=5 // pred_fallthru
      _
    %p2082 = scmp.le.s32.totalorder 2, %s11
    // Predicated region
    $region53: #{animal_model_forward.2} parent=5 // pred_check
      %p2083 = pneg %p2082
    $region54: #{animal_model_forward.2} parent=5 // pred_check_branch
      %2085 = sbr.rel (%p2083) target = $region56
    $region55: #{animal_model_forward.2} parent=5 // pred_region
      %s2086 = ssub.s32 %s11, 2
      // Predicated region
      $region57: #{animal_model_forward.2} parent=55 // pred_check
        %p2087 = pneg %p178
      $region58: #{animal_model_forward.2} parent=55 // pred_check_branch
        %2089 = sbr.rel (%p2087) target = $region60
      $region59: #{animal_model_forward.2} parent=55 // pred_region
        %p2090 = scmp.lt.s32.totalorder %s22, 1
        %s2091 = scalar_select %p2090, %s22, 1
        %s2092 = smul.addr %s2091, 16
        %s2093 = smul.addr %s2092, 8
        %s2094 = scalar_lea.vmem %s5, %s2093
      $region60: #{animal_model_forward.2} parent=55 // pred_fallthru
        _
    $region56: #{animal_model_forward.2} parent=5 // pred_fallthru
      _
  $region6: #{animal_model_forward.2} parent=0 // loop_footer
    %s15 = sadd.s32 1, %s11
  $region7: #{animal_model_forward.2} parent=0 // loop_footer_branch
    %10 = sbr.rel target = $region3
  $region8: #{animal_model_forward.2} parent=0 // loop_exit
    _

</llo_original>
